<compile_context>
chip_gen: v5e
topology: v5e:2x2
jax: 0.10.0
libtpu: 0.0.40
codegen_flags: <defaults>
</compile_context>

<pallas_src>
import math

import jax
import jax.numpy as jnp
from jax.experimental import pallas as pl
from jax.experimental.pallas import tpu as pltpu  # noqa: F401  (no grid/scratch/DMA needed at this size)

# ----------------------------- config (scaled-down BERT) --------------------
VOCAB = 64
HIDDEN = 32
N_HEADS = 2
HEAD_DIM = HIDDEN // N_HEADS
N_LAYERS = 2
INTERMEDIATE = 64
MAX_POS = 16
TYPE_VOCAB = 2
NUM_CLASSES = 2
OUT_PAD = 128            # classifier output padded to one full 128-lane tile
LN_EPS = 1e-12
BATCH = 2
SEQ = 8
BS = BATCH * SEQ

# Row layout of the packed per-layer vector slab `vecs` (N_LAYERS, 8, 128).
ROW_BQKV, ROW_BO, ROW_LN1G, ROW_LN1B, ROW_BI, ROW_BF, ROW_LN2G, ROW_LN2B = range(8)
# Row layout of the packed head vector slab `head_vecs` (8, 128).
ROW_EMBG, ROW_EMBB, ROW_POOLB, ROW_FCB = range(4)


# ----------------------------- in-kernel helpers ----------------------------
def _layernorm(x, gamma, beta):
    mu = jnp.mean(x, axis=-1, keepdims=True)
    var = jnp.mean((x - mu) ** 2, axis=-1, keepdims=True)
    return (x - mu) * jax.lax.rsqrt(var + LN_EPS) * gamma + beta


def _gelu(x):
    # TODO(synk): HF BERT uses exact erf-based GELU; tanh approximation here.
    c = math.sqrt(2.0 / math.pi)
    return 0.5 * x * (1.0 + jnp.tanh(c * (x + 0.044715 * x * x * x)))


# ----------------------------- fused kernel ---------------------------------
def fused_bert_kernel(tok_ref, emb_ref, w_in_ref, w_out_ref, vecs_ref,
                      head_w_ref, head_v_ref, o_ref):
    B, S, H, NH, HD, FF = BATCH, SEQ, HIDDEN, N_HEADS, HEAD_DIM, INTERMEDIATE
    scale = 1.0 / math.sqrt(HD)

    # ---- Embeddings (fused): one-hot gather on the MXU + pre-tiled pos/type.
    ids_col = tok_ref[0:BS, 0:1]                                   # (BS, 1) int32
    onehot = jnp.where(
        ids_col == jax.lax.broadcasted_iota(jnp.int32, (BS, VOCAB), 1),
        1.0, 0.0)                                                  # (BS, VOCAB)
    word = jnp.dot(onehot, emb_ref[0:VOCAB, :],
                   preferred_element_type=jnp.float32)             # (BS, H)
    x = _layernorm(word + emb_ref[VOCAB:VOCAB + BS, :],
                   head_v_ref[ROW_EMBG:ROW_EMBG + 1, 0:H],
                   head_v_ref[ROW_EMBB:ROW_EMBB + 1, 0:H])          # (BS, H)

    # ---- Additive attention-mask bias, built once, hoisted out of the loop.
    am = tok_ref[BS:BS + B, :].astype(jnp.float32)                  # (B, S)
    bias = jnp.broadcast_to(((1.0 - am) * -10000.0)[:, None, :], (B, S, S))
    mask_bh = jnp.concatenate([bias] * NH, axis=0)                  # (NH*B, S, S)

    for l in range(N_LAYERS):                                       # static unroll
        # Packed QKV projection: one lane-dense (BS, H) @ (H, 3H) matmul.
        qkv = jnp.dot(x, w_in_ref[l, 0:H, :],
                      preferred_element_type=jnp.float32) \
            + vecs_ref[l, ROW_BQKV:ROW_BQKV + 1, 0:3 * H]            # (BS, 3H)

        # Merge (head, batch) into one leading batch axis via leading-dim
        # concat (no lane-axis concatenate) -> two batched rank-3 einsums.
        def split_heads(base):
            return jnp.concatenate(
                [qkv[:, base + h * HD: base + (h + 1) * HD].reshape(B, S, HD)
                 for h in range(NH)], axis=0)                        # (NH*B, S, HD)

        q, k, v = split_heads(0), split_heads(H), split_heads(2 * H)

        s = jnp.einsum("bqd,bkd->bqk", q, k,
                       preferred_element_type=jnp.float32) * scale + mask_bh
        s = s - jnp.max(s, axis=-1, keepdims=True)
        p = jnp.exp(s)
        p = p / jnp.sum(p, axis=-1, keepdims=True)                   # exact softmax
        ctx = jnp.einsum("bqk,bkd->bqd", p, v,
                         preferred_element_type=jnp.float32)         # (NH*B, S, HD)

        # Output projection: sum over per-head (sublane-aligned) row blocks of
        # Wo == concat(heads) @ Wo, without the lane concatenation.
        attn = vecs_ref[l, ROW_BO:ROW_BO + 1, 0:H]                   # (1, H) bias
        for h in range(NH):
            attn = attn + jnp.dot(
                ctx[h * B:(h + 1) * B].reshape(BS, HD),
                w_out_ref[l, h * HD:(h + 1) * HD, :],
                preferred_element_type=jnp.float32)
        h1 = _layernorm(x + attn,
                        vecs_ref[l, ROW_LN1G:ROW_LN1G + 1, 0:H],
                        vecs_ref[l, ROW_LN1B:ROW_LN1B + 1, 0:H])

        # Feed-forward.
        inter = _gelu(jnp.dot(h1, w_in_ref[l, H:2 * H, 0:FF],
                              preferred_element_type=jnp.float32)
                      + vecs_ref[l, ROW_BI:ROW_BI + 1, 0:FF])
        ffn = jnp.dot(inter, w_out_ref[l, H:H + FF, :],
                      preferred_element_type=jnp.float32) \
            + vecs_ref[l, ROW_BF:ROW_BF + 1, 0:H]
        x = _layernorm(h1 + ffn,
                       vecs_ref[l, ROW_LN2G:ROW_LN2G + 1, 0:H],
                       vecs_ref[l, ROW_LN2B:ROW_LN2B + 1, 0:H])

    # ---- Pooler + classifier applied to every row (tiny matmuls); the
    # wrapper picks the CLS rows.  Dropout(0.1) is identity in eval mode.
    pooled = jnp.tanh(jnp.dot(x, head_w_ref[0, :, 0:H],
                              preferred_element_type=jnp.float32)
                      + head_v_ref[ROW_POOLB:ROW_POOLB + 1, 0:H])
    o_ref[...] = (jnp.dot(pooled, head_w_ref[1],
                          preferred_element_type=jnp.float32)
                  + head_v_ref[ROW_FCB:ROW_FCB + 1, :])              # (BS, 128)


# ----------------------------- parameters -----------------------------------
def init_params(key):
    """Deterministic scaled-down BERT params, pre-packed into 6 slabs.

    Dense weights are stored as (in, out), i.e. the transpose of
    nn.Linear.weight, so the kernel computes x @ W + b.
    """
    keys = iter(jax.random.split(key, 32))
    nrm = lambda shape: 0.02 * jax.random.normal(next(keys), shape, jnp.float32)
    H, FF = HIDDEN, INTERMEDIATE

    word_emb = nrm((VOCAB, H))
    pos_emb = nrm((MAX_POS, H))
    type_emb = nrm((TYPE_VOCAB, H))
    # Position + token-type (type 0) rows, pre-summed and pre-tiled to the
    # (B*S, H) activation row order -> zero in-kernel tiling cost.
    pos_type = jnp.tile(pos_emb[:SEQ] + type_emb[0][None, :], (BATCH, 1))
    emb_tab = jnp.concatenate([word_emb, pos_type], axis=0)          # (V+BS, H)

    w_in, w_out, vecs = [], [], []
    for _ in range(N_LAYERS):
        wq, wk, wv = nrm((H, H)), nrm((H, H)), nrm((H, H))
        wo, wi, wf = nrm((H, H)), nrm((H, FF)), nrm((FF, H))
        wqkv = jnp.concatenate([wq, wk, wv], axis=1)                 # (H, 3H)
        wi_pad = jnp.zeros((H, 3 * H), jnp.float32).at[:, :FF].set(wi)
        w_in.append(jnp.concatenate([wqkv, wi_pad], axis=0))         # (2H, 3H)
        w_out.append(jnp.concatenate([wo, wf], axis=0))              # (H+FF, H)
        v = jnp.zeros((8, 128), jnp.float32)
        v = v.at[ROW_LN1G, :H].set(1.0).at[ROW_LN2G, :H].set(1.0)
        vecs.append(v)     # biases zero, LayerNorm gammas one (rows per layout)

    pool_w = nrm((H, H))
    fc_w = nrm((H, NUM_CLASSES))
    head_w = jnp.stack([
        jnp.zeros((H, OUT_PAD), jnp.float32).at[:, :H].set(pool_w),
        jnp.zeros((H, OUT_PAD), jnp.float32).at[:, :NUM_CLASSES].set(fc_w),
    ], axis=0)                                                       # (2, H, 128)
    head_vecs = jnp.zeros((8, 128), jnp.float32).at[ROW_EMBG, :H].set(1.0)

    return {
        "emb_tab": emb_tab,
        "w_in": jnp.stack(w_in, axis=0),
        "w_out": jnp.stack(w_out, axis=0),
        "vecs": jnp.stack(vecs, axis=0),
        "head_w": head_w,
        "head_vecs": head_vecs,
    }


# ----------------------------- forward ---------------------------------------
def bert_bad_word_classifier_forward(params, input_ids, attention_mask):
    """Equivalent of BERTBadWordClassifier.forward (eval mode): logits (B, 2)."""
    B, S = input_ids.shape
    assert (B, S) == (BATCH, SEQ), "kernel is specialized to (BATCH, SEQ)"

    # Pack token ids (one per sublane, column 0) and the attention mask
    # (S along lanes) into one int32 slab -> a single HBM->VMEM DMA.
    ids_col = jnp.zeros((B * S, S), jnp.int32).at[:, 0].set(
        input_ids.astype(jnp.int32).reshape(B * S))
    tok = jnp.concatenate([ids_col, attention_mask.astype(jnp.int32)], axis=0)

    # Single fused, gridless pallas_call; every operand is a full-array VMEM
    # block (total working set is a few KiB).
    logits_all = pl.pallas_call(
        fused_bert_kernel,
        out_shape=jax.ShapeDtypeStruct((B * S, OUT_PAD), jnp.float32),
    )(tok, params["emb_tab"], params["w_in"], params["w_out"],
      params["vecs"], params["head_w"], params["head_vecs"])

    # CLS rows (row 0 of each example), first NUM_CLASSES lanes.
    return logits_all[0::S, :NUM_CLASSES]


# ----------------------------- main -------------------------------------------
if __name__ == "__main__":
    key = jax.random.PRNGKey(0)
    pkey, ikey = jax.random.split(key)
    params = init_params(pkey)

    input_ids = jax.random.randint(ikey, (BATCH, SEQ), 0, VOCAB, dtype=jnp.int32)
    attention_mask = jnp.array(
        [[1, 1, 1, 1, 1, 1, 1, 1],
         [1, 1, 1, 1, 1, 0, 0, 0]], dtype=jnp.int32
    )

    logits = bert_bad_word_classifier_forward(params, input_ids, attention_mask)
    logits = jax.block_until_ready(logits)
    assert logits.shape == (BATCH, NUM_CLASSES)
    assert logits.dtype == jnp.float32
    assert bool(jnp.all(jnp.isfinite(logits)))
    print("KERNEL_OK")
</pallas_src>

<mosaic_0001>
module attributes {stable_mosaic.version = 11 : i64} {
  func.func @fused_bert_kernel(%arg0: memref<18x8xi32, #tpu.memory_space<vmem>>, %arg1: memref<80x32xf32, #tpu.memory_space<vmem>>, %arg2: memref<2x64x96xf32, #tpu.memory_space<vmem>>, %arg3: memref<2x96x32xf32, #tpu.memory_space<vmem>>, %arg4: memref<2x8x128xf32, #tpu.memory_space<vmem>>, %arg5: memref<2x32x128xf32, #tpu.memory_space<vmem>>, %arg6: memref<8x128xf32, #tpu.memory_space<vmem>>, %arg7: memref<16x128xf32, #tpu.memory_space<vmem>>) attributes {dimension_semantics = [], scalar_prefetch = 0 : i64, scratch_operands = 0 : i64, tpu.core_type = #tpu.core_type<tc>} {
    %c0 = arith.constant 0 : index
    %c0_0 = arith.constant 0 : index
    %0 = vector.load %arg0[%c0, %c0_0] : memref<18x8xi32, #tpu.memory_space<vmem>>, vector<16x1xi32>
    %1 = tpu.iota {dimensions = array<i32: 1>} : vector<16x64xi32>
    %2 = vector.broadcast %0 : vector<16x1xi32> to vector<16x64xi32>
    %3 = arith.cmpi eq, %2, %1 : vector<16x64xi32>
    %cst = arith.constant 1.000000e+00 : f32
    %cst_1 = arith.constant 0.000000e+00 : f32
    %4 = vector.broadcast %cst : f32 to vector<16x64xf32>
    %5 = vector.broadcast %cst_1 : f32 to vector<16x64xf32>
    %6 = arith.select %3, %4, %5 : vector<16x64xi1>, vector<16x64xf32>
    %c0_2 = arith.constant 0 : index
    %c0_3 = arith.constant 0 : index
    %7 = vector.load %arg1[%c0_2, %c0_3] : memref<80x32xf32, #tpu.memory_space<vmem>>, vector<64x32xf32>
    %cst_4 = arith.constant dense<0.000000e+00> : vector<16x32xf32>
    %8 = tpu.matmul %6, %7, %cst_4 {dimension_numbers = #tpu.dot_dimension_numbers<[1], [0], [0], [1], [0, 0, 1, 1], [], []>} : vector<16x64xf32>, vector<64x32xf32>, vector<16x32xf32> -> vector<16x32xf32>
    %c64 = arith.constant 64 : index
    %c0_5 = arith.constant 0 : index
    %9 = vector.load %arg1[%c64, %c0_5] : memref<80x32xf32, #tpu.memory_space<vmem>>, vector<16x32xf32>
    %10 = arith.addf %8, %9 : vector<16x32xf32>
    %c0_6 = arith.constant 0 : index
    %c0_7 = arith.constant 0 : index
    %11 = vector.load %arg6[%c0_6, %c0_7] : memref<8x128xf32, #tpu.memory_space<vmem>>, vector<1x32xf32>
    %c1 = arith.constant 1 : index
    %c0_8 = arith.constant 0 : index
    %12 = vector.load %arg6[%c1, %c0_8] : memref<8x128xf32, #tpu.memory_space<vmem>>, vector<1x32xf32>
    %cst_9 = arith.constant dense<0.000000e+00> : vector<16xf32>
    %13 = vector.multi_reduction <add>, %10, %cst_9 [1] : vector<16x32xf32> to vector<16xf32>
    %14 = vector.shape_cast %13 : vector<16xf32> to vector<16x1xf32>
    %cst_10 = arith.constant 3.200000e+01 : f32
    %15 = vector.broadcast %cst_10 : f32 to vector<16x1xf32>
    %16 = arith.divf %14, %15 : vector<16x1xf32>
    %17 = vector.broadcast %16 : vector<16x1xf32> to vector<16x32xf32>
    %18 = arith.subf %10, %17 : vector<16x32xf32>
    %19 = arith.mulf %18, %18 : vector<16x32xf32>
    %cst_11 = arith.constant dense<0.000000e+00> : vector<16xf32>
    %20 = vector.multi_reduction <add>, %19, %cst_11 [1] : vector<16x32xf32> to vector<16xf32>
    %21 = vector.shape_cast %20 : vector<16xf32> to vector<16x1xf32>
    %cst_12 = arith.constant 3.200000e+01 : f32
    %22 = vector.broadcast %cst_12 : f32 to vector<16x1xf32>
    %23 = arith.divf %21, %22 : vector<16x1xf32>
    %24 = vector.broadcast %16 : vector<16x1xf32> to vector<16x32xf32>
    %25 = arith.subf %10, %24 : vector<16x32xf32>
    %cst_13 = arith.constant 9.99999996E-13 : f32
    %26 = vector.broadcast %cst_13 : f32 to vector<16x1xf32>
    %27 = arith.addf %23, %26 : vector<16x1xf32>
    %28 = math.rsqrt %27 : vector<16x1xf32>
    %29 = vector.broadcast %28 : vector<16x1xf32> to vector<16x32xf32>
    %30 = arith.mulf %25, %29 : vector<16x32xf32>
    %31 = vector.broadcast %11 : vector<1x32xf32> to vector<16x32xf32>
    %32 = arith.mulf %30, %31 : vector<16x32xf32>
    %33 = vector.broadcast %12 : vector<1x32xf32> to vector<16x32xf32>
    %34 = arith.addf %32, %33 : vector<16x32xf32>
    %c16 = arith.constant 16 : index
    %c0_14 = arith.constant 0 : index
    %35 = vector.load %arg0[%c16, %c0_14] : memref<18x8xi32, #tpu.memory_space<vmem>>, vector<2x8xi32>
    %36 = arith.sitofp %35 : vector<2x8xi32> to vector<2x8xf32>
    %cst_15 = arith.constant 1.000000e+00 : f32
    %37 = vector.broadcast %cst_15 : f32 to vector<2x8xf32>
    %38 = arith.subf %37, %36 : vector<2x8xf32>
    %cst_16 = arith.constant -1.000000e+04 : f32
    %39 = vector.broadcast %cst_16 : f32 to vector<2x8xf32>
    %40 = arith.mulf %38, %39 : vector<2x8xf32>
    %41 = vector.shape_cast %40 : vector<2x8xf32> to vector<2x1x8xf32>
    %42 = vector.shape_cast %41 : vector<2x1x8xf32> to vector<2x1x8xf32>
    %43 = vector.broadcast %42 : vector<2x1x8xf32> to vector<2x8x8xf32>
    %44 = tpu.concatenate %43, %43 in 0 : vector<2x8x8xf32>, vector<2x8x8xf32> -> vector<4x8x8xf32>
    %c0_17 = arith.constant 0 : index
    %c0_18 = arith.constant 0 : index
    %c0_19 = arith.constant 0 : index
    %45 = vector.load %arg2[%c0_17, %c0_18, %c0_19] : memref<2x64x96xf32, #tpu.memory_space<vmem>>, vector<1x32x96xf32>
    %46 = vector.shape_cast %45 : vector<1x32x96xf32> to vector<32x96xf32>
    %cst_20 = arith.constant dense<0.000000e+00> : vector<16x96xf32>
    %47 = tpu.matmul %34, %46, %cst_20 {dimension_numbers = #tpu.dot_dimension_numbers<[1], [0], [0], [1], [0, 0, 1, 1], [], []>} : vector<16x32xf32>, vector<32x96xf32>, vector<16x96xf32> -> vector<16x96xf32>
    %c0_21 = arith.constant 0 : index
    %c0_22 = arith.constant 0 : index
    %c0_23 = arith.constant 0 : index
    %48 = vector.load %arg4[%c0_21, %c0_22, %c0_23] : memref<2x8x128xf32, #tpu.memory_space<vmem>>, vector<1x1x96xf32>
    %49 = vector.shape_cast %48 : vector<1x1x96xf32> to vector<1x96xf32>
    %50 = vector.broadcast %49 : vector<1x96xf32> to vector<16x96xf32>
    %51 = arith.addf %47, %50 : vector<16x96xf32>
    %52 = vector.extract_strided_slice %51 {offsets = [0, 0], sizes = [16, 16], strides = [1, 1]} : vector<16x96xf32> to vector<16x16xf32>
    %53 = vector.shape_cast %52 : vector<16x16xf32> to vector<2x8x16xf32>
    %54 = vector.extract_strided_slice %51 {offsets = [0, 16], sizes = [16, 16], strides = [1, 1]} : vector<16x96xf32> to vector<16x16xf32>
    %55 = vector.shape_cast %54 : vector<16x16xf32> to vector<2x8x16xf32>
    %56 = tpu.concatenate %53, %55 in 0 : vector<2x8x16xf32>, vector<2x8x16xf32> -> vector<4x8x16xf32>
    %57 = vector.extract_strided_slice %51 {offsets = [0, 32], sizes = [16, 16], strides = [1, 1]} : vector<16x96xf32> to vector<16x16xf32>
    %58 = vector.shape_cast %57 : vector<16x16xf32> to vector<2x8x16xf32>
    %59 = vector.extract_strided_slice %51 {offsets = [0, 48], sizes = [16, 16], strides = [1, 1]} : vector<16x96xf32> to vector<16x16xf32>
    %60 = vector.shape_cast %59 : vector<16x16xf32> to vector<2x8x16xf32>
    %61 = tpu.concatenate %58, %60 in 0 : vector<2x8x16xf32>, vector<2x8x16xf32> -> vector<4x8x16xf32>
    %62 = vector.extract_strided_slice %51 {offsets = [0, 64], sizes = [16, 16], strides = [1, 1]} : vector<16x96xf32> to vector<16x16xf32>
    %63 = vector.shape_cast %62 : vector<16x16xf32> to vector<2x8x16xf32>
    %64 = vector.extract_strided_slice %51 {offsets = [0, 80], sizes = [16, 16], strides = [1, 1]} : vector<16x96xf32> to vector<16x16xf32>
    %65 = vector.shape_cast %64 : vector<16x16xf32> to vector<2x8x16xf32>
    %66 = tpu.concatenate %63, %65 in 0 : vector<2x8x16xf32>, vector<2x8x16xf32> -> vector<4x8x16xf32>
    "tpu.trace_start"() <{level = 10 : i32, message = "bqd,bkd->bqk"}> : () -> ()
    %cst_24 = arith.constant dense<0.000000e+00> : vector<4x8x8xf32>
    %67 = tpu.matmul %56, %61, %cst_24 {dimension_numbers = #tpu.dot_dimension_numbers<[2], [2], [1], [1], [0, 0, 0, 1, 1, 1], [0], [0]>} : vector<4x8x16xf32>, vector<4x8x16xf32>, vector<4x8x8xf32> -> vector<4x8x8xf32>
    "tpu.trace_stop"() : () -> ()
    %cst_25 = arith.constant 2.500000e-01 : f32
    %68 = vector.broadcast %cst_25 : f32 to vector<4x8x8xf32>
    %69 = arith.mulf %67, %68 : vector<4x8x8xf32>
    %70 = arith.addf %69, %44 : vector<4x8x8xf32>
    %cst_26 = arith.constant dense<0xFF800000> : vector<4x8xf32>
    %71 = vector.multi_reduction <maximumf>, %70, %cst_26 [2] : vector<4x8x8xf32> to vector<4x8xf32>
    %72 = vector.shape_cast %71 : vector<4x8xf32> to vector<4x8x1xf32>
    %73 = vector.broadcast %72 : vector<4x8x1xf32> to vector<4x8x8xf32>
    %74 = arith.subf %70, %73 : vector<4x8x8xf32>
    %75 = math.exp %74 : vector<4x8x8xf32>
    %cst_27 = arith.constant dense<0.000000e+00> : vector<4x8xf32>
    %76 = vector.multi_reduction <add>, %75, %cst_27 [2] : vector<4x8x8xf32> to vector<4x8xf32>
    %77 = vector.shape_cast %76 : vector<4x8xf32> to vector<4x8x1xf32>
    %78 = vector.broadcast %77 : vector<4x8x1xf32> to vector<4x8x8xf32>
    %79 = arith.divf %75, %78 : vector<4x8x8xf32>
    "tpu.trace_start"() <{level = 10 : i32, message = "bqk,bkd->bqd"}> : () -> ()
    %cst_28 = arith.constant dense<0.000000e+00> : vector<4x8x16xf32>
    %80 = tpu.matmul %79, %66, %cst_28 {dimension_numbers = #tpu.dot_dimension_numbers<[2], [1], [1], [2], [0, 0, 0, 1, 1, 2], [0], [0]>} : vector<4x8x8xf32>, vector<4x8x16xf32>, vector<4x8x16xf32> -> vector<4x8x16xf32>
    "tpu.trace_stop"() : () -> ()
    %c0_29 = arith.constant 0 : index
    %c1_30 = arith.constant 1 : index
    %c0_31 = arith.constant 0 : index
    %81 = vector.load %arg4[%c0_29, %c1_30, %c0_31] : memref<2x8x128xf32, #tpu.memory_space<vmem>>, vector<1x1x32xf32>
    %82 = vector.shape_cast %81 : vector<1x1x32xf32> to vector<1x32xf32>
    %83 = vector.extract_strided_slice %80 {offsets = [0, 0, 0], sizes = [2, 8, 16], strides = [1, 1, 1]} : vector<4x8x16xf32> to vector<2x8x16xf32>
    %84 = vector.shape_cast %83 : vector<2x8x16xf32> to vector<16x16xf32>
    %c0_32 = arith.constant 0 : index
    %c0_33 = arith.constant 0 : index
    %c0_34 = arith.constant 0 : index
    %85 = vector.load %arg3[%c0_32, %c0_33, %c0_34] : memref<2x96x32xf32, #tpu.memory_space<vmem>>, vector<1x16x32xf32>
    %86 = vector.shape_cast %85 : vector<1x16x32xf32> to vector<16x32xf32>
    %cst_35 = arith.constant dense<0.000000e+00> : vector<16x32xf32>
    %87 = tpu.matmul %84, %86, %cst_35 {dimension_numbers = #tpu.dot_dimension_numbers<[1], [0], [0], [1], [0, 0, 1, 1], [], []>} : vector<16x16xf32>, vector<16x32xf32>, vector<16x32xf32> -> vector<16x32xf32>
    %88 = vector.broadcast %82 : vector<1x32xf32> to vector<16x32xf32>
    %89 = arith.addf %88, %87 : vector<16x32xf32>
    %90 = vector.extract_strided_slice %80 {offsets = [2, 0, 0], sizes = [2, 8, 16], strides = [1, 1, 1]} : vector<4x8x16xf32> to vector<2x8x16xf32>
    %91 = vector.shape_cast %90 : vector<2x8x16xf32> to vector<16x16xf32>
    %c0_36 = arith.constant 0 : index
    %c16_37 = arith.constant 16 : index
    %c0_38 = arith.constant 0 : index
    %92 = vector.load %arg3[%c0_36, %c16_37, %c0_38] : memref<2x96x32xf32, #tpu.memory_space<vmem>>, vector<1x16x32xf32>
    %93 = vector.shape_cast %92 : vector<1x16x32xf32> to vector<16x32xf32>
    %cst_39 = arith.constant dense<0.000000e+00> : vector<16x32xf32>
    %94 = tpu.matmul %91, %93, %cst_39 {dimension_numbers = #tpu.dot_dimension_numbers<[1], [0], [0], [1], [0, 0, 1, 1], [], []>} : vector<16x16xf32>, vector<16x32xf32>, vector<16x32xf32> -> vector<16x32xf32>
    %95 = arith.addf %89, %94 : vector<16x32xf32>
    %96 = arith.addf %34, %95 : vector<16x32xf32>
    %c0_40 = arith.constant 0 : index
    %c2 = arith.constant 2 : index
    %c0_41 = arith.constant 0 : index
    %97 = vector.load %arg4[%c0_40, %c2, %c0_41] : memref<2x8x128xf32, #tpu.memory_space<vmem>>, vector<1x1x32xf32>
    %98 = vector.shape_cast %97 : vector<1x1x32xf32> to vector<1x32xf32>
    %c0_42 = arith.constant 0 : index
    %c3 = arith.constant 3 : index
    %c0_43 = arith.constant 0 : index
    %99 = vector.load %arg4[%c0_42, %c3, %c0_43] : memref<2x8x128xf32, #tpu.memory_space<vmem>>, vector<1x1x32xf32>
    %100 = vector.shape_cast %99 : vector<1x1x32xf32> to vector<1x32xf32>
    %cst_44 = arith.constant dense<0.000000e+00> : vector<16xf32>
    %101 = vector.multi_reduction <add>, %96, %cst_44 [1] : vector<16x32xf32> to vector<16xf32>
    %102 = vector.shape_cast %101 : vector<16xf32> to vector<16x1xf32>
    %cst_45 = arith.constant 3.200000e+01 : f32
    %103 = vector.broadcast %cst_45 : f32 to vector<16x1xf32>
    %104 = arith.divf %102, %103 : vector<16x1xf32>
    %105 = vector.broadcast %104 : vector<16x1xf32> to vector<16x32xf32>
    %106 = arith.subf %96, %105 : vector<16x32xf32>
    %107 = arith.mulf %106, %106 : vector<16x32xf32>
    %cst_46 = arith.constant dense<0.000000e+00> : vector<16xf32>
    %108 = vector.multi_reduction <add>, %107, %cst_46 [1] : vector<16x32xf32> to vector<16xf32>
    %109 = vector.shape_cast %108 : vector<16xf32> to vector<16x1xf32>
    %cst_47 = arith.constant 3.200000e+01 : f32
    %110 = vector.broadcast %cst_47 : f32 to vector<16x1xf32>
    %111 = arith.divf %109, %110 : vector<16x1xf32>
    %112 = vector.broadcast %104 : vector<16x1xf32> to vector<16x32xf32>
    %113 = arith.subf %96, %112 : vector<16x32xf32>
    %cst_48 = arith.constant 9.99999996E-13 : f32
    %114 = vector.broadcast %cst_48 : f32 to vector<16x1xf32>
    %115 = arith.addf %111, %114 : vector<16x1xf32>
    %116 = math.rsqrt %115 : vector<16x1xf32>
    %117 = vector.broadcast %116 : vector<16x1xf32> to vector<16x32xf32>
    %118 = arith.mulf %113, %117 : vector<16x32xf32>
    %119 = vector.broadcast %98 : vector<1x32xf32> to vector<16x32xf32>
    %120 = arith.mulf %118, %119 : vector<16x32xf32>
    %121 = vector.broadcast %100 : vector<1x32xf32> to vector<16x32xf32>
    %122 = arith.addf %120, %121 : vector<16x32xf32>
    %c0_49 = arith.constant 0 : index
    %c32 = arith.constant 32 : index
    %c0_50 = arith.constant 0 : index
    %123 = vector.load %arg2[%c0_49, %c32, %c0_50] : memref<2x64x96xf32, #tpu.memory_space<vmem>>, vector<1x32x64xf32>
    %124 = vector.shape_cast %123 : vector<1x32x64xf32> to vector<32x64xf32>
    %cst_51 = arith.constant dense<0.000000e+00> : vector<16x64xf32>
    %125 = tpu.matmul %122, %124, %cst_51 {dimension_numbers = #tpu.dot_dimension_numbers<[1], [0], [0], [1], [0, 0, 1, 1], [], []>} : vector<16x32xf32>, vector<32x64xf32>, vector<16x64xf32> -> vector<16x64xf32>
    %c0_52 = arith.constant 0 : index
    %c4 = arith.constant 4 : index
    %c0_53 = arith.constant 0 : index
    %126 = vector.load %arg4[%c0_52, %c4, %c0_53] : memref<2x8x128xf32, #tpu.memory_space<vmem>>, vector<1x1x64xf32>
    %127 = vector.shape_cast %126 : vector<1x1x64xf32> to vector<1x64xf32>
    %128 = vector.broadcast %127 : vector<1x64xf32> to vector<16x64xf32>
    %129 = arith.addf %125, %128 : vector<16x64xf32>
    %cst_54 = arith.constant 5.000000e-01 : f32
    %130 = vector.broadcast %cst_54 : f32 to vector<16x64xf32>
    %131 = arith.mulf %130, %129 : vector<16x64xf32>
    %cst_55 = arith.constant 4.471500e-02 : f32
    %132 = vector.broadcast %cst_55 : f32 to vector<16x64xf32>
    %133 = arith.mulf %132, %129 : vector<16x64xf32>
    %134 = arith.mulf %133, %129 : vector<16x64xf32>
    %135 = arith.mulf %134, %129 : vector<16x64xf32>
    %136 = arith.addf %129, %135 : vector<16x64xf32>
    %cst_56 = arith.constant 0.797884583 : f32
    %137 = vector.broadcast %cst_56 : f32 to vector<16x64xf32>
    %138 = arith.mulf %137, %136 : vector<16x64xf32>
    %139 = math.tanh %138 : vector<16x64xf32>
    %cst_57 = arith.constant 1.000000e+00 : f32
    %140 = vector.broadcast %cst_57 : f32 to vector<16x64xf32>
    %141 = arith.addf %140, %139 : vector<16x64xf32>
    %142 = arith.mulf %131, %141 : vector<16x64xf32>
    %c0_58 = arith.constant 0 : index
    %c32_59 = arith.constant 32 : index
    %c0_60 = arith.constant 0 : index
    %143 = vector.load %arg3[%c0_58, %c32_59, %c0_60] : memref<2x96x32xf32, #tpu.memory_space<vmem>>, vector<1x64x32xf32>
    %144 = vector.shape_cast %143 : vector<1x64x32xf32> to vector<64x32xf32>
    %cst_61 = arith.constant dense<0.000000e+00> : vector<16x32xf32>
    %145 = tpu.matmul %142, %144, %cst_61 {dimension_numbers = #tpu.dot_dimension_numbers<[1], [0], [0], [1], [0, 0, 1, 1], [], []>} : vector<16x64xf32>, vector<64x32xf32>, vector<16x32xf32> -> vector<16x32xf32>
    %c0_62 = arith.constant 0 : index
    %c5 = arith.constant 5 : index
    %c0_63 = arith.constant 0 : index
    %146 = vector.load %arg4[%c0_62, %c5, %c0_63] : memref<2x8x128xf32, #tpu.memory_space<vmem>>, vector<1x1x32xf32>
    %147 = vector.shape_cast %146 : vector<1x1x32xf32> to vector<1x32xf32>
    %148 = vector.broadcast %147 : vector<1x32xf32> to vector<16x32xf32>
    %149 = arith.addf %145, %148 : vector<16x32xf32>
    %150 = arith.addf %122, %149 : vector<16x32xf32>
    %c0_64 = arith.constant 0 : index
    %c6 = arith.constant 6 : index
    %c0_65 = arith.constant 0 : index
    %151 = vector.load %arg4[%c0_64, %c6, %c0_65] : memref<2x8x128xf32, #tpu.memory_space<vmem>>, vector<1x1x32xf32>
    %152 = vector.shape_cast %151 : vector<1x1x32xf32> to vector<1x32xf32>
    %c0_66 = arith.constant 0 : index
    %c7 = arith.constant 7 : index
    %c0_67 = arith.constant 0 : index
    %153 = vector.load %arg4[%c0_66, %c7, %c0_67] : memref<2x8x128xf32, #tpu.memory_space<vmem>>, vector<1x1x32xf32>
    %154 = vector.shape_cast %153 : vector<1x1x32xf32> to vector<1x32xf32>
    %cst_68 = arith.constant dense<0.000000e+00> : vector<16xf32>
    %155 = vector.multi_reduction <add>, %150, %cst_68 [1] : vector<16x32xf32> to vector<16xf32>
    %156 = vector.shape_cast %155 : vector<16xf32> to vector<16x1xf32>
    %cst_69 = arith.constant 3.200000e+01 : f32
    %157 = vector.broadcast %cst_69 : f32 to vector<16x1xf32>
    %158 = arith.divf %156, %157 : vector<16x1xf32>
    %159 = vector.broadcast %158 : vector<16x1xf32> to vector<16x32xf32>
    %160 = arith.subf %150, %159 : vector<16x32xf32>
    %161 = arith.mulf %160, %160 : vector<16x32xf32>
    %cst_70 = arith.constant dense<0.000000e+00> : vector<16xf32>
    %162 = vector.multi_reduction <add>, %161, %cst_70 [1] : vector<16x32xf32> to vector<16xf32>
    %163 = vector.shape_cast %162 : vector<16xf32> to vector<16x1xf32>
    %cst_71 = arith.constant 3.200000e+01 : f32
    %164 = vector.broadcast %cst_71 : f32 to vector<16x1xf32>
    %165 = arith.divf %163, %164 : vector<16x1xf32>
    %166 = vector.broadcast %158 : vector<16x1xf32> to vector<16x32xf32>
    %167 = arith.subf %150, %166 : vector<16x32xf32>
    %cst_72 = arith.constant 9.99999996E-13 : f32
    %168 = vector.broadcast %cst_72 : f32 to vector<16x1xf32>
    %169 = arith.addf %165, %168 : vector<16x1xf32>
    %170 = math.rsqrt %169 : vector<16x1xf32>
    %171 = vector.broadcast %170 : vector<16x1xf32> to vector<16x32xf32>
    %172 = arith.mulf %167, %171 : vector<16x32xf32>
    %173 = vector.broadcast %152 : vector<1x32xf32> to vector<16x32xf32>
    %174 = arith.mulf %172, %173 : vector<16x32xf32>
    %175 = vector.broadcast %154 : vector<1x32xf32> to vector<16x32xf32>
    %176 = arith.addf %174, %175 : vector<16x32xf32>
    %c1_73 = arith.constant 1 : index
    %c0_74 = arith.constant 0 : index
    %c0_75 = arith.constant 0 : index
    %177 = vector.load %arg2[%c1_73, %c0_74, %c0_75] : memref<2x64x96xf32, #tpu.memory_space<vmem>>, vector<1x32x96xf32>
    %178 = vector.shape_cast %177 : vector<1x32x96xf32> to vector<32x96xf32>
    %cst_76 = arith.constant dense<0.000000e+00> : vector<16x96xf32>
    %179 = tpu.matmul %176, %178, %cst_76 {dimension_numbers = #tpu.dot_dimension_numbers<[1], [0], [0], [1], [0, 0, 1, 1], [], []>} : vector<16x32xf32>, vector<32x96xf32>, vector<16x96xf32> -> vector<16x96xf32>
    %c1_77 = arith.constant 1 : index
    %c0_78 = arith.constant 0 : index
    %c0_79 = arith.constant 0 : index
    %180 = vector.load %arg4[%c1_77, %c0_78, %c0_79] : memref<2x8x128xf32, #tpu.memory_space<vmem>>, vector<1x1x96xf32>
    %181 = vector.shape_cast %180 : vector<1x1x96xf32> to vector<1x96xf32>
    %182 = vector.broadcast %181 : vector<1x96xf32> to vector<16x96xf32>
    %183 = arith.addf %179, %182 : vector<16x96xf32>
    %184 = vector.extract_strided_slice %183 {offsets = [0, 0], sizes = [16, 16], strides = [1, 1]} : vector<16x96xf32> to vector<16x16xf32>
    %185 = vector.shape_cast %184 : vector<16x16xf32> to vector<2x8x16xf32>
    %186 = vector.extract_strided_slice %183 {offsets = [0, 16], sizes = [16, 16], strides = [1, 1]} : vector<16x96xf32> to vector<16x16xf32>
    %187 = vector.shape_cast %186 : vector<16x16xf32> to vector<2x8x16xf32>
    %188 = tpu.concatenate %185, %187 in 0 : vector<2x8x16xf32>, vector<2x8x16xf32> -> vector<4x8x16xf32>
    %189 = vector.extract_strided_slice %183 {offsets = [0, 32], sizes = [16, 16], strides = [1, 1]} : vector<16x96xf32> to vector<16x16xf32>
    %190 = vector.shape_cast %189 : vector<16x16xf32> to vector<2x8x16xf32>
    %191 = vector.extract_strided_slice %183 {offsets = [0, 48], sizes = [16, 16], strides = [1, 1]} : vector<16x96xf32> to vector<16x16xf32>
    %192 = vector.shape_cast %191 : vector<16x16xf32> to vector<2x8x16xf32>
    %193 = tpu.concatenate %190, %192 in 0 : vector<2x8x16xf32>, vector<2x8x16xf32> -> vector<4x8x16xf32>
    %194 = vector.extract_strided_slice %183 {offsets = [0, 64], sizes = [16, 16], strides = [1, 1]} : vector<16x96xf32> to vector<16x16xf32>
    %195 = vector.shape_cast %194 : vector<16x16xf32> to vector<2x8x16xf32>
    %196 = vector.extract_strided_slice %183 {offsets = [0, 80], sizes = [16, 16], strides = [1, 1]} : vector<16x96xf32> to vector<16x16xf32>
    %197 = vector.shape_cast %196 : vector<16x16xf32> to vector<2x8x16xf32>
    %198 = tpu.concatenate %195, %197 in 0 : vector<2x8x16xf32>, vector<2x8x16xf32> -> vector<4x8x16xf32>
    "tpu.trace_start"() <{level = 10 : i32, message = "bqd,bkd->bqk"}> : () -> ()
    %cst_80 = arith.constant dense<0.000000e+00> : vector<4x8x8xf32>
    %199 = tpu.matmul %188, %193, %cst_80 {dimension_numbers = #tpu.dot_dimension_numbers<[2], [2], [1], [1], [0, 0, 0, 1, 1, 1], [0], [0]>} : vector<4x8x16xf32>, vector<4x8x16xf32>, vector<4x8x8xf32> -> vector<4x8x8xf32>
    "tpu.trace_stop"() : () -> ()
    %cst_81 = arith.constant 2.500000e-01 : f32
    %200 = vector.broadcast %cst_81 : f32 to vector<4x8x8xf32>
    %201 = arith.mulf %199, %200 : vector<4x8x8xf32>
    %202 = arith.addf %201, %44 : vector<4x8x8xf32>
    %cst_82 = arith.constant dense<0xFF800000> : vector<4x8xf32>
    %203 = vector.multi_reduction <maximumf>, %202, %cst_82 [2] : vector<4x8x8xf32> to vector<4x8xf32>
    %204 = vector.shape_cast %203 : vector<4x8xf32> to vector<4x8x1xf32>
    %205 = vector.broadcast %204 : vector<4x8x1xf32> to vector<4x8x8xf32>
    %206 = arith.subf %202, %205 : vector<4x8x8xf32>
    %207 = math.exp %206 : vector<4x8x8xf32>
    %cst_83 = arith.constant dense<0.000000e+00> : vector<4x8xf32>
    %208 = vector.multi_reduction <add>, %207, %cst_83 [2] : vector<4x8x8xf32> to vector<4x8xf32>
    %209 = vector.shape_cast %208 : vector<4x8xf32> to vector<4x8x1xf32>
    %210 = vector.broadcast %209 : vector<4x8x1xf32> to vector<4x8x8xf32>
    %211 = arith.divf %207, %210 : vector<4x8x8xf32>
    "tpu.trace_start"() <{level = 10 : i32, message = "bqk,bkd->bqd"}> : () -> ()
    %cst_84 = arith.constant dense<0.000000e+00> : vector<4x8x16xf32>
    %212 = tpu.matmul %211, %198, %cst_84 {dimension_numbers = #tpu.dot_dimension_numbers<[2], [1], [1], [2], [0, 0, 0, 1, 1, 2], [0], [0]>} : vector<4x8x8xf32>, vector<4x8x16xf32>, vector<4x8x16xf32> -> vector<4x8x16xf32>
    "tpu.trace_stop"() : () -> ()
    %c1_85 = arith.constant 1 : index
    %c1_86 = arith.constant 1 : index
    %c0_87 = arith.constant 0 : index
    %213 = vector.load %arg4[%c1_85, %c1_86, %c0_87] : memref<2x8x128xf32, #tpu.memory_space<vmem>>, vector<1x1x32xf32>
    %214 = vector.shape_cast %213 : vector<1x1x32xf32> to vector<1x32xf32>
    %215 = vector.extract_strided_slice %212 {offsets = [0, 0, 0], sizes = [2, 8, 16], strides = [1, 1, 1]} : vector<4x8x16xf32> to vector<2x8x16xf32>
    %216 = vector.shape_cast %215 : vector<2x8x16xf32> to vector<16x16xf32>
    %c1_88 = arith.constant 1 : index
    %c0_89 = arith.constant 0 : index
    %c0_90 = arith.constant 0 : index
    %217 = vector.load %arg3[%c1_88, %c0_89, %c0_90] : memref<2x96x32xf32, #tpu.memory_space<vmem>>, vector<1x16x32xf32>
    %218 = vector.shape_cast %217 : vector<1x16x32xf32> to vector<16x32xf32>
    %cst_91 = arith.constant dense<0.000000e+00> : vector<16x32xf32>
    %219 = tpu.matmul %216, %218, %cst_91 {dimension_numbers = #tpu.dot_dimension_numbers<[1], [0], [0], [1], [0, 0, 1, 1], [], []>} : vector<16x16xf32>, vector<16x32xf32>, vector<16x32xf32> -> vector<16x32xf32>
    %220 = vector.broadcast %214 : vector<1x32xf32> to vector<16x32xf32>
    %221 = arith.addf %220, %219 : vector<16x32xf32>
    %222 = vector.extract_strided_slice %212 {offsets = [2, 0, 0], sizes = [2, 8, 16], strides = [1, 1, 1]} : vector<4x8x16xf32> to vector<2x8x16xf32>
    %223 = vector.shape_cast %222 : vector<2x8x16xf32> to vector<16x16xf32>
    %c1_92 = arith.constant 1 : index
    %c16_93 = arith.constant 16 : index
    %c0_94 = arith.constant 0 : index
    %224 = vector.load %arg3[%c1_92, %c16_93, %c0_94] : memref<2x96x32xf32, #tpu.memory_space<vmem>>, vector<1x16x32xf32>
    %225 = vector.shape_cast %224 : vector<1x16x32xf32> to vector<16x32xf32>
    %cst_95 = arith.constant dense<0.000000e+00> : vector<16x32xf32>
    %226 = tpu.matmul %223, %225, %cst_95 {dimension_numbers = #tpu.dot_dimension_numbers<[1], [0], [0], [1], [0, 0, 1, 1], [], []>} : vector<16x16xf32>, vector<16x32xf32>, vector<16x32xf32> -> vector<16x32xf32>
    %227 = arith.addf %221, %226 : vector<16x32xf32>
    %228 = arith.addf %176, %227 : vector<16x32xf32>
    %c1_96 = arith.constant 1 : index
    %c2_97 = arith.constant 2 : index
    %c0_98 = arith.constant 0 : index
    %229 = vector.load %arg4[%c1_96, %c2_97, %c0_98] : memref<2x8x128xf32, #tpu.memory_space<vmem>>, vector<1x1x32xf32>
    %230 = vector.shape_cast %229 : vector<1x1x32xf32> to vector<1x32xf32>
    %c1_99 = arith.constant 1 : index
    %c3_100 = arith.constant 3 : index
    %c0_101 = arith.constant 0 : index
    %231 = vector.load %arg4[%c1_99, %c3_100, %c0_101] : memref<2x8x128xf32, #tpu.memory_space<vmem>>, vector<1x1x32xf32>
    %232 = vector.shape_cast %231 : vector<1x1x32xf32> to vector<1x32xf32>
    %cst_102 = arith.constant dense<0.000000e+00> : vector<16xf32>
    %233 = vector.multi_reduction <add>, %228, %cst_102 [1] : vector<16x32xf32> to vector<16xf32>
    %234 = vector.shape_cast %233 : vector<16xf32> to vector<16x1xf32>
    %cst_103 = arith.constant 3.200000e+01 : f32
    %235 = vector.broadcast %cst_103 : f32 to vector<16x1xf32>
    %236 = arith.divf %234, %235 : vector<16x1xf32>
    %237 = vector.broadcast %236 : vector<16x1xf32> to vector<16x32xf32>
    %238 = arith.subf %228, %237 : vector<16x32xf32>
    %239 = arith.mulf %238, %238 : vector<16x32xf32>
    %cst_104 = arith.constant dense<0.000000e+00> : vector<16xf32>
    %240 = vector.multi_reduction <add>, %239, %cst_104 [1] : vector<16x32xf32> to vector<16xf32>
    %241 = vector.shape_cast %240 : vector<16xf32> to vector<16x1xf32>
    %cst_105 = arith.constant 3.200000e+01 : f32
    %242 = vector.broadcast %cst_105 : f32 to vector<16x1xf32>
    %243 = arith.divf %241, %242 : vector<16x1xf32>
    %244 = vector.broadcast %236 : vector<16x1xf32> to vector<16x32xf32>
    %245 = arith.subf %228, %244 : vector<16x32xf32>
    %cst_106 = arith.constant 9.99999996E-13 : f32
    %246 = vector.broadcast %cst_106 : f32 to vector<16x1xf32>
    %247 = arith.addf %243, %246 : vector<16x1xf32>
    %248 = math.rsqrt %247 : vector<16x1xf32>
    %249 = vector.broadcast %248 : vector<16x1xf32> to vector<16x32xf32>
    %250 = arith.mulf %245, %249 : vector<16x32xf32>
    %251 = vector.broadcast %230 : vector<1x32xf32> to vector<16x32xf32>
    %252 = arith.mulf %250, %251 : vector<16x32xf32>
    %253 = vector.broadcast %232 : vector<1x32xf32> to vector<16x32xf32>
    %254 = arith.addf %252, %253 : vector<16x32xf32>
    %c1_107 = arith.constant 1 : index
    %c32_108 = arith.constant 32 : index
    %c0_109 = arith.constant 0 : index
    %255 = vector.load %arg2[%c1_107, %c32_108, %c0_109] : memref<2x64x96xf32, #tpu.memory_space<vmem>>, vector<1x32x64xf32>
    %256 = vector.shape_cast %255 : vector<1x32x64xf32> to vector<32x64xf32>
    %cst_110 = arith.constant dense<0.000000e+00> : vector<16x64xf32>
    %257 = tpu.matmul %254, %256, %cst_110 {dimension_numbers = #tpu.dot_dimension_numbers<[1], [0], [0], [1], [0, 0, 1, 1], [], []>} : vector<16x32xf32>, vector<32x64xf32>, vector<16x64xf32> -> vector<16x64xf32>
    %c1_111 = arith.constant 1 : index
    %c4_112 = arith.constant 4 : index
    %c0_113 = arith.constant 0 : index
    %258 = vector.load %arg4[%c1_111, %c4_112, %c0_113] : memref<2x8x128xf32, #tpu.memory_space<vmem>>, vector<1x1x64xf32>
    %259 = vector.shape_cast %258 : vector<1x1x64xf32> to vector<1x64xf32>
    %260 = vector.broadcast %259 : vector<1x64xf32> to vector<16x64xf32>
    %261 = arith.addf %257, %260 : vector<16x64xf32>
    %cst_114 = arith.constant 5.000000e-01 : f32
    %262 = vector.broadcast %cst_114 : f32 to vector<16x64xf32>
    %263 = arith.mulf %262, %261 : vector<16x64xf32>
    %cst_115 = arith.constant 4.471500e-02 : f32
    %264 = vector.broadcast %cst_115 : f32 to vector<16x64xf32>
    %265 = arith.mulf %264, %261 : vector<16x64xf32>
    %266 = arith.mulf %265, %261 : vector<16x64xf32>
    %267 = arith.mulf %266, %261 : vector<16x64xf32>
    %268 = arith.addf %261, %267 : vector<16x64xf32>
    %cst_116 = arith.constant 0.797884583 : f32
    %269 = vector.broadcast %cst_116 : f32 to vector<16x64xf32>
    %270 = arith.mulf %269, %268 : vector<16x64xf32>
    %271 = math.tanh %270 : vector<16x64xf32>
    %cst_117 = arith.constant 1.000000e+00 : f32
    %272 = vector.broadcast %cst_117 : f32 to vector<16x64xf32>
    %273 = arith.addf %272, %271 : vector<16x64xf32>
    %274 = arith.mulf %263, %273 : vector<16x64xf32>
    %c1_118 = arith.constant 1 : index
    %c32_119 = arith.constant 32 : index
    %c0_120 = arith.constant 0 : index
    %275 = vector.load %arg3[%c1_118, %c32_119, %c0_120] : memref<2x96x32xf32, #tpu.memory_space<vmem>>, vector<1x64x32xf32>
    %276 = vector.shape_cast %275 : vector<1x64x32xf32> to vector<64x32xf32>
    %cst_121 = arith.constant dense<0.000000e+00> : vector<16x32xf32>
    %277 = tpu.matmul %274, %276, %cst_121 {dimension_numbers = #tpu.dot_dimension_numbers<[1], [0], [0], [1], [0, 0, 1, 1], [], []>} : vector<16x64xf32>, vector<64x32xf32>, vector<16x32xf32> -> vector<16x32xf32>
    %c1_122 = arith.constant 1 : index
    %c5_123 = arith.constant 5 : index
    %c0_124 = arith.constant 0 : index
    %278 = vector.load %arg4[%c1_122, %c5_123, %c0_124] : memref<2x8x128xf32, #tpu.memory_space<vmem>>, vector<1x1x32xf32>
    %279 = vector.shape_cast %278 : vector<1x1x32xf32> to vector<1x32xf32>
    %280 = vector.broadcast %279 : vector<1x32xf32> to vector<16x32xf32>
    %281 = arith.addf %277, %280 : vector<16x32xf32>
    %282 = arith.addf %254, %281 : vector<16x32xf32>
    %c1_125 = arith.constant 1 : index
    %c6_126 = arith.constant 6 : index
    %c0_127 = arith.constant 0 : index
    %283 = vector.load %arg4[%c1_125, %c6_126, %c0_127] : memref<2x8x128xf32, #tpu.memory_space<vmem>>, vector<1x1x32xf32>
    %284 = vector.shape_cast %283 : vector<1x1x32xf32> to vector<1x32xf32>
    %c1_128 = arith.constant 1 : index
    %c7_129 = arith.constant 7 : index
    %c0_130 = arith.constant 0 : index
    %285 = vector.load %arg4[%c1_128, %c7_129, %c0_130] : memref<2x8x128xf32, #tpu.memory_space<vmem>>, vector<1x1x32xf32>
    %286 = vector.shape_cast %285 : vector<1x1x32xf32> to vector<1x32xf32>
    %cst_131 = arith.constant dense<0.000000e+00> : vector<16xf32>
    %287 = vector.multi_reduction <add>, %282, %cst_131 [1] : vector<16x32xf32> to vector<16xf32>
    %288 = vector.shape_cast %287 : vector<16xf32> to vector<16x1xf32>
    %cst_132 = arith.constant 3.200000e+01 : f32
    %289 = vector.broadcast %cst_132 : f32 to vector<16x1xf32>
    %290 = arith.divf %288, %289 : vector<16x1xf32>
    %291 = vector.broadcast %290 : vector<16x1xf32> to vector<16x32xf32>
    %292 = arith.subf %282, %291 : vector<16x32xf32>
    %293 = arith.mulf %292, %292 : vector<16x32xf32>
    %cst_133 = arith.constant dense<0.000000e+00> : vector<16xf32>
    %294 = vector.multi_reduction <add>, %293, %cst_133 [1] : vector<16x32xf32> to vector<16xf32>
    %295 = vector.shape_cast %294 : vector<16xf32> to vector<16x1xf32>
    %cst_134 = arith.constant 3.200000e+01 : f32
    %296 = vector.broadcast %cst_134 : f32 to vector<16x1xf32>
    %297 = arith.divf %295, %296 : vector<16x1xf32>
    %298 = vector.broadcast %290 : vector<16x1xf32> to vector<16x32xf32>
    %299 = arith.subf %282, %298 : vector<16x32xf32>
    %cst_135 = arith.constant 9.99999996E-13 : f32
    %300 = vector.broadcast %cst_135 : f32 to vector<16x1xf32>
    %301 = arith.addf %297, %300 : vector<16x1xf32>
    %302 = math.rsqrt %301 : vector<16x1xf32>
    %303 = vector.broadcast %302 : vector<16x1xf32> to vector<16x32xf32>
    %304 = arith.mulf %299, %303 : vector<16x32xf32>
    %305 = vector.broadcast %284 : vector<1x32xf32> to vector<16x32xf32>
    %306 = arith.mulf %304, %305 : vector<16x32xf32>
    %307 = vector.broadcast %286 : vector<1x32xf32> to vector<16x32xf32>
    %308 = arith.addf %306, %307 : vector<16x32xf32>
    %c0_136 = arith.constant 0 : index
    %c0_137 = arith.constant 0 : index
    %c0_138 = arith.constant 0 : index
    %309 = vector.load %arg5[%c0_136, %c0_137, %c0_138] : memref<2x32x128xf32, #tpu.memory_space<vmem>>, vector<1x32x32xf32>
    %310 = vector.shape_cast %309 : vector<1x32x32xf32> to vector<32x32xf32>
    %cst_139 = arith.constant dense<0.000000e+00> : vector<16x32xf32>
    %311 = tpu.matmul %308, %310, %cst_139 {dimension_numbers = #tpu.dot_dimension_numbers<[1], [0], [0], [1], [0, 0, 1, 1], [], []>} : vector<16x32xf32>, vector<32x32xf32>, vector<16x32xf32> -> vector<16x32xf32>
    %c2_140 = arith.constant 2 : index
    %c0_141 = arith.constant 0 : index
    %312 = vector.load %arg6[%c2_140, %c0_141] : memref<8x128xf32, #tpu.memory_space<vmem>>, vector<1x32xf32>
    %313 = vector.broadcast %312 : vector<1x32xf32> to vector<16x32xf32>
    %314 = arith.addf %311, %313 : vector<16x32xf32>
    %315 = math.tanh %314 : vector<16x32xf32>
    %c1_142 = arith.constant 1 : index
    %c0_143 = arith.constant 0 : index
    %c0_144 = arith.constant 0 : index
    %316 = vector.load %arg5[%c1_142, %c0_143, %c0_144] : memref<2x32x128xf32, #tpu.memory_space<vmem>>, vector<1x32x128xf32>
    %317 = vector.shape_cast %316 : vector<1x32x128xf32> to vector<32x128xf32>
    %cst_145 = arith.constant dense<0.000000e+00> : vector<16x128xf32>
    %318 = tpu.matmul %315, %317, %cst_145 {dimension_numbers = #tpu.dot_dimension_numbers<[1], [0], [0], [1], [0, 0, 1, 1], [], []>} : vector<16x32xf32>, vector<32x128xf32>, vector<16x128xf32> -> vector<16x128xf32>
    %c3_146 = arith.constant 3 : index
    %c0_147 = arith.constant 0 : index
    %319 = vector.load %arg6[%c3_146, %c0_147] : memref<8x128xf32, #tpu.memory_space<vmem>>, vector<1x128xf32>
    %320 = vector.broadcast %319 : vector<1x128xf32> to vector<16x128xf32>
    %321 = arith.addf %318, %320 : vector<16x128xf32>
    %c0_148 = arith.constant 0 : index
    %c0_149 = arith.constant 0 : index
    %322 = vector.load %arg7[%c0_148, %c0_149] : memref<16x128xf32, #tpu.memory_space<vmem>>, vector<16x128xf32>
    tpu.vector_store %arg7[%c0_148, %c0_149], %321 {strides = array<i32>} : memref<16x128xf32, #tpu.memory_space<vmem>>, vector<16x128xf32>,
    return
  }
}

</mosaic_0001>

<llo_original>
// kernel: tpu_custom_call.1
$region0: #{tpu_custom_call.1}
  #allocation0 [shape = 'u32[]', space=smem, size = 0x4, offset = 0x4, fixed_abs, tag = 'smem constant byte address 0x4 - core index']
  #allocation1 [shape = 'u32[72,128]{1,0:T(1,128)}', space=vmem, size = 0x9000, scoped, tag = 'internal scratch']
  %s0 = inlined_call_operand.vmem [shape: s32[18,8], index: 0, kind: input, shape index: {}]
  %s1 = inlined_call_operand.vmem [shape: f32[80,32], index: 1, kind: input, shape index: {}]
  %s2 = inlined_call_operand.vmem [shape: f32[2,64,96], index: 2, kind: input, shape index: {}]
  %s3 = inlined_call_operand.vmem [shape: f32[2,96,32], index: 3, kind: input, shape index: {}]
  %s4 = inlined_call_operand.vmem [shape: f32[2,8,128], index: 4, kind: input, shape index: {}]
  %s5 = inlined_call_operand.vmem [shape: f32[2,32,128], index: 5, kind: input, shape index: {}]
  %s6 = inlined_call_operand.vmem [shape: f32[8,128], index: 6, kind: input, shape index: {}]
  %s7 = inlined_call_operand.hbm [shape: f32[16,128], index: 7, kind: output, shape index: {}]
  %s8 = sld [smem:[#allocation0]]
  $region38: #{tpu_custom_call.1} parent=0
    _
  %s10 = ssub.s32 1, %s8
  %s11 = scalar_select 0, %s10, %s8
  $region1: #{tpu_custom_call.1} parent=0
    #allocation2 [shape = 'u8[8192]{0}', space=vmem, size = 0x2000, scoped, tag = 'output window, operand 0, single buffered']
    #allocation3 [shape = 's32[1]{0}', space=sflag, size = 0x4, scoped, tag = 'scoped memory for tpu_custom_call.1']
    %12 = vsyncpa [#allocation3], 0
    // Predicated region
    $region2: #{tpu_custom_call.1} parent=1 // pred_check
      _
    $region3: #{tpu_custom_call.1} parent=1 // pred_check_branch
      %14 = sbr.rel (0) target = $region5
    $region4: #{tpu_custom_call.1} parent=1 // pred_region
      _
    $region5: #{tpu_custom_call.1} parent=1 // pred_fallthru
      _
    // Predicated region
    $region6: #{tpu_custom_call.1} parent=1 // pred_check
      _
    $region7: #{tpu_custom_call.1} parent=1 // pred_check_branch
      %16 = sbr.rel (0) target = $region9
    $region8: #{tpu_custom_call.1} parent=1 // pred_region
      _
    $region9: #{tpu_custom_call.1} parent=1 // pred_fallthru
      _
    // Predicated region
    $region10: #{tpu_custom_call.1} parent=1 // pred_check
      _
    $region11: #{tpu_custom_call.1} parent=1 // pred_check_branch
      %18 = sbr.rel (0) target = $region13
    $region12: #{tpu_custom_call.1} parent=1 // pred_region
      _
    $region13: #{tpu_custom_call.1} parent=1 // pred_fallthru
      _
    // Predicated region
    $region14: #{tpu_custom_call.1} parent=1 // pred_check
      _
    $region15: #{tpu_custom_call.1} parent=1 // pred_check_branch
      %20 = sbr.rel (0) target = $region17
    $region16: #{tpu_custom_call.1} parent=1 // pred_region
      _
    $region17: #{tpu_custom_call.1} parent=1 // pred_fallthru
      _
    // Predicated region
    $region18: #{tpu_custom_call.1} parent=1 // pred_check
      _
    $region19: #{tpu_custom_call.1} parent=1 // pred_check_branch
      %22 = sbr.rel (0) target = $region21
    $region20: #{tpu_custom_call.1} parent=1 // pred_region
      _
    $region21: #{tpu_custom_call.1} parent=1 // pred_fallthru
      _
    // Predicated region
    $region22: #{tpu_custom_call.1} parent=1 // pred_check
      _
    $region23: #{tpu_custom_call.1} parent=1 // pred_check_branch
      %24 = sbr.rel (0) target = $region25
    $region24: #{tpu_custom_call.1} parent=1 // pred_region
      _
    $region25: #{tpu_custom_call.1} parent=1 // pred_fallthru
      _
    // Predicated region
    $region26: #{tpu_custom_call.1} parent=1 // pred_check
      _
    $region27: #{tpu_custom_call.1} parent=1 // pred_check_branch
      %26 = sbr.rel (0) target = $region29
    $region28: #{tpu_custom_call.1} parent=1 // pred_region
      _
    $region29: #{tpu_custom_call.1} parent=1 // pred_fallthru
      _
    %v27 = vld [vmem:[%s0] sm:$0xff]
    %v28 = vld [vmem:[%s0 + $0x8] sm:$0xff]
    %v29 = vlaneseq
    %v30 = vand.u32 %v29, 127
    %31 = vset.pattern.permute.xlu0 0
    %32 = vperm.xlu0 %31, %v27
    %v33 = vpop.permute.xlu0 %32
    %34 = vset.pattern.permute.xlu0 0
    %35 = vperm.xlu0 %34, %v28
    %v36 = vpop.permute.xlu0 %35
    %vm37 = vcmp.eq.s32.totalorder %v33, %v30
    %vm38 = vcmp.eq.s32.totalorder %v36, %v30
    %v39 = vsel %vm37, 1.0, 0.0
    %v40 = vsel %vm38, 1.0, 0.0
    %v41 = vld [vmem:[%s1] sm:$0xff]
    %v42 = vld [vmem:[%s1 + $0x8] sm:$0xff]
    %v43 = vld [vmem:[%s1 + $0x10] sm:$0xff]
    %v44 = vld [vmem:[%s1 + $0x18] sm:$0xff]
    %v45 = vld [vmem:[%s1 + $0x20] sm:$0xff]
    %v46 = vld [vmem:[%s1 + $0x28] sm:$0xff]
    %v47 = vld [vmem:[%s1 + $0x30] sm:$0xff]
    %v48 = vld [vmem:[%s1 + $0x38] sm:$0xff]
    %v49 = vld [vmem:[%s1 + $0x40] sm:$0xff]
    %v50 = vld [vmem:[%s1 + $0x48] sm:$0xff]
    %vm51 = vcmask 523264
    %v53 = vsel %vm51, %v39, 0
    %v56 = vsel %vm51, %v40, 0
    %58 = vmatpush.msra.mxu0 0.0
    %59 = vmatpush.msra.mxu0 0.0
    %60 = vmatpush.msra.mxu0 0.0
    %61 = vmatpush.msra.mxu0 0.0
    %62 = vmatpush.msra.mxu0 0.0
    %63 = vmatpush.msra.mxu0 0.0
    %64 = vmatpush.msra.mxu0 0.0
    %65 = vmatpush.msra.mxu0 0.0
    %66 = vmatpush.msra.mxu0 %v48
    %67 = vmatpush.msra.mxu0 %v47
    %68 = vmatpush.msra.mxu0 %v46
    %69 = vmatpush.msra.mxu0 %v45
    %70 = vmatpush.msra.mxu0 %v44
    %71 = vmatpush.msra.mxu0 %v43
    %72 = vmatpush.msra.mxu0 %v42
    %73 = vmatpush.msra.mxu0 %v41
    %74 = vmatmul.f32.gmra.mxu0 %v53
    %v75 = vpop.f32.mrf.mxu0
    %v76 = vadd.f32 %v49, %v75
    %77 = vmatmul.f32.gmra.mxu0 %v56
    %v78 = vpop.f32.mrf.mxu0
    %v79 = vadd.f32 %v50, %v78
    %80 = vdwg.mxu0
    %v81 = vld [vmem:[%s6] sm:$0x1]
    %v82 = vld [vmem:[%s6 + $0x1] sm:$0x1]
    %vm83 = vcmask 261120
    %v84 = vsel %vm83, %v76, 0.0
    %85 = vadd.xlane.f32.xlu0 %v84
    %v86 = vpop.xlane.xlu0 %85
    %v87 = vsel %vm83, %v79, 0.0
    %88 = vadd.xlane.f32.xlu0 %v87
    %v89 = vpop.xlane.xlu0 %88
    %v90 = vrcp.pop 32.0
    %v91 = vmul.f32 32.0, %v90
    %v92 = vsub.f32 1.0, %v91
    %v93 = vmul.f32 %v90, %v92
    %v94 = vadd.f32 %v90, %v93
    %vm95 = vweird.f32 %v90
    %v96 = vsel %vm95, %v90, %v94
    %v97 = vmul.f32 %v86, %v96
    %v98 = vmul.f32 %v89, %v96
    %v99 = vsub.f32 %v76, %v97
    %v100 = vsub.f32 %v79, %v98
    %v101 = vmul.f32 %v99, %v99
    %v102 = vmul.f32 %v100, %v100
    %v103 = vsel %vm83, %v101, 0.0
    %104 = vadd.xlane.f32.xlu0 %v103
    %v105 = vpop.xlane.xlu0 %104
    %v106 = vsel %vm83, %v102, 0.0
    %107 = vadd.xlane.f32.xlu0 %v106
    %v108 = vpop.xlane.xlu0 %107
    %v109 = vmul.f32 %v105, %v96
    %v110 = vmul.f32 %v108, %v96
    %v111 = vadd.f32 %v109, 1e-12
    %v112 = vadd.f32 %v110, 1e-12
    %v113 = vrsqrt.pop %v111
    %v114 = vmul.f32 %v113, %v111
    %v115 = vmul.f32 %v114, %v113
    %v116 = vmul.f32 0.5, %v115
    %v117 = vsub.f32 1.5, %v116
    %v118 = vmul.f32 %v113, %v117
    %vm119 = vweird.f32 %v111
    %vm120 = vweird.f32 %v113
    %vm121 = vmor %vm119, %vm120
    %v122 = vsel %vm121, %v113, %v118
    %v123 = vrsqrt.pop %v112
    %v124 = vmul.f32 %v123, %v112
    %v125 = vmul.f32 %v124, %v123
    %v126 = vmul.f32 0.5, %v125
    %v127 = vsub.f32 1.5, %v126
    %v128 = vmul.f32 %v123, %v127
    %vm129 = vweird.f32 %v112
    %vm130 = vweird.f32 %v123
    %vm131 = vmor %vm129, %vm130
    %v132 = vsel %vm131, %v123, %v128
    %v133 = vmul.f32 %v99, %v122
    %v134 = vmul.f32 %v100, %v132
    %v135 = vperm.slane %v81, 0
    %v136 = vmul.f32 %v133, %v135
    %v137 = vmul.f32 %v134, %v135
    %v138 = vperm.slane %v82, 0
    %v139 = vadd.f32 %v136, %v138
    %v140 = vadd.f32 %v137, %v138
    %v141 = vld [vmem:[%s0 + $0x10] sm:$0x3]
    %v142 = vcvt.s32.f32 %v141
    %v143 = vsub.f32 1.0, %v142
    %v144 = vmul.f32 %v143, -10000.0
    %v146 = vrot.slane %v144, 1
    %v147 = vperm.slane %v144, 0
    %v148 = vperm.slane %v146, 0
    %v151 = vld [vmem:[%s2] sm:$0xff]
    %v152 = vld [vmem:[%s2 + $0x8] sm:$0xff]
    %v153 = vld [vmem:[%s2 + $0x10] sm:$0xff]
    %v154 = vld [vmem:[%s2 + $0x18] sm:$0xff]
    %v155 = vld [vmem:[%s4] sm:$0x1]
    %v156 = vperm.slane %v155, 0
    %v158 = vsel %vm83, %v139, 0
    %v161 = vsel %vm83, %v140, 0
    %163 = vmatpush.msra.mxu0 0.0
    %164 = vmatpush.msra.mxu0 0.0
    %165 = vmatpush.msra.mxu0 0.0
    %166 = vmatpush.msra.mxu0 0.0
    %167 = vmatpush.msra.mxu0 0.0
    %168 = vmatpush.msra.mxu0 0.0
    %169 = vmatpush.msra.mxu0 0.0
    %170 = vmatpush.msra.mxu0 0.0
    %171 = vmatpush.msra.mxu0 0.0
    %172 = vmatpush.msra.mxu0 0.0
    %173 = vmatpush.msra.mxu0 0.0
    %174 = vmatpush.msra.mxu0 0.0
    %175 = vmatpush.msra.mxu0 %v154
    %176 = vmatpush.msra.mxu0 %v153
    %177 = vmatpush.msra.mxu0 %v152
    %178 = vmatpush.msra.mxu0 %v151
    %179 = vmatmul.f32.gmra.mxu0 %v158
    %v180 = vpop.f32.mrf.mxu0
    %v181 = vadd.f32 %v156, %v180
    %182 = vmatmul.f32.gmra.mxu0 %v161
    %v183 = vpop.f32.mrf.mxu0
    %v184 = vadd.f32 %v156, %v183
    %185 = vdwg.mxu0
    %188 = vrot.lane.b32.xlu0 %v181, 112
    %v189 = vpop.permute.xlu0 %188
    %190 = vrot.lane.b32.xlu0 %v184, 112
    %v191 = vpop.permute.xlu0 %190
    %192 = vrot.lane.b32.xlu0 %v181, 96
    %v193 = vpop.permute.xlu0 %192
    %vm194 = vcmask 130048
    %v195 = vsel %vm194, %v181, 0
    %v197 = vsel %vm194, %v193, 0
    %199 = vmatpush.xpose.msra.mxu0 0.0
    %200 = vmatpush.xpose.msra.mxu0 0.0
    %201 = vmatpush.xpose.msra.mxu0 0.0
    %202 = vmatpush.xpose.msra.mxu0 0.0
    %203 = vmatpush.xpose.msra.mxu0 0.0
    %204 = vmatpush.xpose.msra.mxu0 0.0
    %205 = vmatpush.xpose.msra.mxu0 0.0
    %206 = vmatpush.xpose.msra.mxu0 0.0
    %207 = vmatpush.xpose.msra.mxu0 0.0
    %208 = vmatpush.xpose.msra.mxu0 0.0
    %209 = vmatpush.xpose.msra.mxu0 0.0
    %210 = vmatpush.xpose.msra.mxu0 0.0
    %211 = vmatpush.xpose.msra.mxu0 0.0
    %212 = vmatpush.xpose.msra.mxu0 0.0
    %213 = vmatpush.xpose.msra.mxu0 0.0
    %214 = vmatpush.xpose.msra.mxu0 %v197
    %215 = vmatmul.f32.gmra.mxu0 %v195
    %v216 = vpop.f32.mrf.mxu0
    %v217 = vadd.f32 0.0, %v216
    %218 = vdwg.mxu0
    %219 = vrot.lane.b32.xlu0 %v184, 96
    %v220 = vpop.permute.xlu0 %219
    %v221 = vsel %vm194, %v184, 0
    %v223 = vsel %vm194, %v220, 0
    %225 = vmatpush.xpose.msra.mxu0 0.0
    %226 = vmatpush.xpose.msra.mxu0 0.0
    %227 = vmatpush.xpose.msra.mxu0 0.0
    %228 = vmatpush.xpose.msra.mxu0 0.0
    %229 = vmatpush.xpose.msra.mxu0 0.0
    %230 = vmatpush.xpose.msra.mxu0 0.0
    %231 = vmatpush.xpose.msra.mxu0 0.0
    %232 = vmatpush.xpose.msra.mxu0 0.0
    %233 = vmatpush.xpose.msra.mxu0 0.0
    %234 = vmatpush.xpose.msra.mxu0 0.0
    %235 = vmatpush.xpose.msra.mxu0 0.0
    %236 = vmatpush.xpose.msra.mxu0 0.0
    %237 = vmatpush.xpose.msra.mxu0 0.0
    %238 = vmatpush.xpose.msra.mxu0 0.0
    %239 = vmatpush.xpose.msra.mxu0 0.0
    %240 = vmatpush.xpose.msra.mxu0 %v223
    %241 = vmatmul.f32.gmra.mxu0 %v221
    %v242 = vpop.f32.mrf.mxu0
    %v243 = vadd.f32 0.0, %v242
    %244 = vdwg.mxu0
    %245 = vrot.lane.b32.xlu0 %v189, 96
    %v246 = vpop.permute.xlu0 %245
    %v247 = vsel %vm194, %v189, 0
    %v249 = vsel %vm194, %v246, 0
    %251 = vmatpush.xpose.msra.mxu0 0.0
    %252 = vmatpush.xpose.msra.mxu0 0.0
    %253 = vmatpush.xpose.msra.mxu0 0.0
    %254 = vmatpush.xpose.msra.mxu0 0.0
    %255 = vmatpush.xpose.msra.mxu0 0.0
    %256 = vmatpush.xpose.msra.mxu0 0.0
    %257 = vmatpush.xpose.msra.mxu0 0.0
    %258 = vmatpush.xpose.msra.mxu0 0.0
    %259 = vmatpush.xpose.msra.mxu0 0.0
    %260 = vmatpush.xpose.msra.mxu0 0.0
    %261 = vmatpush.xpose.msra.mxu0 0.0
    %262 = vmatpush.xpose.msra.mxu0 0.0
    %263 = vmatpush.xpose.msra.mxu0 0.0
    %264 = vmatpush.xpose.msra.mxu0 0.0
    %265 = vmatpush.xpose.msra.mxu0 0.0
    %266 = vmatpush.xpose.msra.mxu0 %v249
    %267 = vmatmul.f32.gmra.mxu0 %v247
    %v268 = vpop.f32.mrf.mxu0
    %v269 = vadd.f32 0.0, %v268
    %270 = vdwg.mxu0
    %271 = vrot.lane.b32.xlu0 %v191, 96
    %v272 = vpop.permute.xlu0 %271
    %v273 = vsel %vm194, %v191, 0
    %v275 = vsel %vm194, %v272, 0
    %277 = vmatpush.xpose.msra.mxu0 0.0
    %278 = vmatpush.xpose.msra.mxu0 0.0
    %279 = vmatpush.xpose.msra.mxu0 0.0
    %280 = vmatpush.xpose.msra.mxu0 0.0
    %281 = vmatpush.xpose.msra.mxu0 0.0
    %282 = vmatpush.xpose.msra.mxu0 0.0
    %283 = vmatpush.xpose.msra.mxu0 0.0
    %284 = vmatpush.xpose.msra.mxu0 0.0
    %285 = vmatpush.xpose.msra.mxu0 0.0
    %286 = vmatpush.xpose.msra.mxu0 0.0
    %287 = vmatpush.xpose.msra.mxu0 0.0
    %288 = vmatpush.xpose.msra.mxu0 0.0
    %289 = vmatpush.xpose.msra.mxu0 0.0
    %290 = vmatpush.xpose.msra.mxu0 0.0
    %291 = vmatpush.xpose.msra.mxu0 0.0
    %292 = vmatpush.xpose.msra.mxu0 %v275
    %293 = vmatmul.f32.gmra.mxu0 %v273
    %v294 = vpop.f32.mrf.mxu0
    %v295 = vadd.f32 0.0, %v294
    %296 = vdwg.mxu0
    %v297 = vmul.f32 %v217, 0.25
    %v298 = vmul.f32 %v243, 0.25
    %v299 = vmul.f32 %v269, 0.25
    %v300 = vmul.f32 %v295, 0.25
    %v301 = vadd.f32 %v297, %v147
    %v302 = vadd.f32 %v298, %v148
    %v303 = vadd.f32 %v299, %v147
    %v304 = vadd.f32 %v300, %v148
    %vm305 = vcmask 64512
    %v306 = vsel %vm305, %v301, -inf
    %307 = vmax.xlane.f32.xlu0 %v306
    %v308 = vpop.xlane.xlu0 %307
    %v309 = vsel %vm305, %v302, -inf
    %310 = vmax.xlane.f32.xlu0 %v309
    %v311 = vpop.xlane.xlu0 %310
    %v312 = vsel %vm305, %v303, -inf
    %313 = vmax.xlane.f32.xlu0 %v312
    %v314 = vpop.xlane.xlu0 %313
    %v315 = vsel %vm305, %v304, -inf
    %316 = vmax.xlane.f32.xlu0 %v315
    %v317 = vpop.xlane.xlu0 %316
    %v318 = vsub.f32 %v301, %v308
    %v319 = vsub.f32 %v302, %v311
    %v320 = vsub.f32 %v303, %v314
    %v321 = vsub.f32 %v304, %v317
    %v322 = vmul.f32 %v318, 1.442695
    %v323 = vpow.pop %v322
    %v324 = vmul.f32 %v319, 1.442695
    %v325 = vpow.pop %v324
    %v326 = vmul.f32 %v320, 1.442695
    %v327 = vpow.pop %v326
    %v328 = vmul.f32 %v321, 1.442695
    %v329 = vpow.pop %v328
    %v330 = vsel %vm305, %v323, 0.0
    %331 = vadd.xlane.f32.xlu0 %v330
    %v332 = vpop.xlane.xlu0 %331
    %v333 = vsel %vm305, %v325, 0.0
    %334 = vadd.xlane.f32.xlu0 %v333
    %v335 = vpop.xlane.xlu0 %334
    %v336 = vsel %vm305, %v327, 0.0
    %337 = vadd.xlane.f32.xlu0 %v336
    %v338 = vpop.xlane.xlu0 %337
    %v339 = vsel %vm305, %v329, 0.0
    %340 = vadd.xlane.f32.xlu0 %v339
    %v341 = vpop.xlane.xlu0 %340
    %v342 = vrcp.pop %v332
    %v343 = vmul.f32 %v332, %v342
    %v344 = vsub.f32 1.0, %v343
    %v345 = vmul.f32 %v342, %v344
    %v346 = vadd.f32 %v342, %v345
    %vm347 = vweird.f32 %v332
    %vm348 = vweird.f32 %v342
    %vm349 = vmor %vm347, %vm348
    %v350 = vsel %vm349, %v342, %v346
    %v351 = vand.u32 2147483647, %v332
    %vm352 = vcmp.eq.f32.partialorder %v351, 8.507059e+37
    %v353 = vand.u32 %v332, 2147483648
    %v354 = vor.u32 1.1754944e-38, %v353
    %v355 = vsel %vm352, %v354, %v350
    %v356 = vmul.f32 %v323, %v355
    %v357 = vrcp.pop %v335
    %v358 = vmul.f32 %v335, %v357
    %v359 = vsub.f32 1.0, %v358
    %v360 = vmul.f32 %v357, %v359
    %v361 = vadd.f32 %v357, %v360
    %vm362 = vweird.f32 %v335
    %vm363 = vweird.f32 %v357
    %vm364 = vmor %vm362, %vm363
    %v365 = vsel %vm364, %v357, %v361
    %v366 = vand.u32 2147483647, %v335
    %vm367 = vcmp.eq.f32.partialorder %v366, 8.507059e+37
    %v368 = vand.u32 %v335, 2147483648
    %v369 = vor.u32 1.1754944e-38, %v368
    %v370 = vsel %vm367, %v369, %v365
    %v371 = vmul.f32 %v325, %v370
    %v372 = vrcp.pop %v338
    %v373 = vmul.f32 %v338, %v372
    %v374 = vsub.f32 1.0, %v373
    %v375 = vmul.f32 %v372, %v374
    %v376 = vadd.f32 %v372, %v375
    %vm377 = vweird.f32 %v338
    %vm378 = vweird.f32 %v372
    %vm379 = vmor %vm377, %vm378
    %v380 = vsel %vm379, %v372, %v376
    %v381 = vand.u32 2147483647, %v338
    %vm382 = vcmp.eq.f32.partialorder %v381, 8.507059e+37
    %v383 = vand.u32 %v338, 2147483648
    %v384 = vor.u32 1.1754944e-38, %v383
    %v385 = vsel %vm382, %v384, %v380
    %v386 = vmul.f32 %v327, %v385
    %v387 = vrcp.pop %v341
    %v388 = vmul.f32 %v341, %v387
    %v389 = vsub.f32 1.0, %v388
    %v390 = vmul.f32 %v387, %v389
    %v391 = vadd.f32 %v387, %v390
    %vm392 = vweird.f32 %v341
    %vm393 = vweird.f32 %v387
    %vm394 = vmor %vm392, %vm393
    %v395 = vsel %vm394, %v387, %v391
    %v396 = vand.u32 2147483647, %v341
    %vm397 = vcmp.eq.f32.partialorder %v396, 8.507059e+37
    %v398 = vand.u32 %v341, 2147483648
    %v399 = vor.u32 1.1754944e-38, %v398
    %v400 = vsel %vm397, %v399, %v395
    %v401 = vmul.f32 %v329, %v400
    %402 = vrot.lane.b32.xlu0 %v181, 64
    %v403 = vpop.permute.xlu0 %402
    %v406 = vsel %vm305, %v356, 0
    %408 = vmatpush.msra.mxu0 0.0
    %409 = vmatpush.msra.mxu0 0.0
    %410 = vmatpush.msra.mxu0 0.0
    %411 = vmatpush.msra.mxu0 0.0
    %412 = vmatpush.msra.mxu0 0.0
    %413 = vmatpush.msra.mxu0 0.0
    %414 = vmatpush.msra.mxu0 0.0
    %415 = vmatpush.msra.mxu0 0.0
    %416 = vmatpush.msra.mxu0 0.0
    %417 = vmatpush.msra.mxu0 0.0
    %418 = vmatpush.msra.mxu0 0.0
    %419 = vmatpush.msra.mxu0 0.0
    %420 = vmatpush.msra.mxu0 0.0
    %421 = vmatpush.msra.mxu0 0.0
    %422 = vmatpush.msra.mxu0 0.0
    %423 = vmatpush.msra.mxu0 %v403
    %424 = vmatmul.f32.gmra.mxu0 %v406
    %v425 = vpop.f32.mrf.mxu0
    %v426 = vadd.f32 0.0, %v425
    %427 = vdwg.mxu0
    %428 = vrot.lane.b32.xlu0 %v184, 64
    %v429 = vpop.permute.xlu0 %428
    %v432 = vsel %vm305, %v371, 0
    %434 = vmatpush.msra.mxu0 0.0
    %435 = vmatpush.msra.mxu0 0.0
    %436 = vmatpush.msra.mxu0 0.0
    %437 = vmatpush.msra.mxu0 0.0
    %438 = vmatpush.msra.mxu0 0.0
    %439 = vmatpush.msra.mxu0 0.0
    %440 = vmatpush.msra.mxu0 0.0
    %441 = vmatpush.msra.mxu0 0.0
    %442 = vmatpush.msra.mxu0 0.0
    %443 = vmatpush.msra.mxu0 0.0
    %444 = vmatpush.msra.mxu0 0.0
    %445 = vmatpush.msra.mxu0 0.0
    %446 = vmatpush.msra.mxu0 0.0
    %447 = vmatpush.msra.mxu0 0.0
    %448 = vmatpush.msra.mxu0 0.0
    %449 = vmatpush.msra.mxu0 %v429
    %450 = vmatmul.f32.gmra.mxu0 %v432
    %v451 = vpop.f32.mrf.mxu0
    %v452 = vadd.f32 0.0, %v451
    %453 = vdwg.mxu0
    %454 = vrot.lane.b32.xlu0 %v189, 64
    %v455 = vpop.permute.xlu0 %454
    %v458 = vsel %vm305, %v386, 0
    %460 = vmatpush.msra.mxu0 0.0
    %461 = vmatpush.msra.mxu0 0.0
    %462 = vmatpush.msra.mxu0 0.0
    %463 = vmatpush.msra.mxu0 0.0
    %464 = vmatpush.msra.mxu0 0.0
    %465 = vmatpush.msra.mxu0 0.0
    %466 = vmatpush.msra.mxu0 0.0
    %467 = vmatpush.msra.mxu0 0.0
    %468 = vmatpush.msra.mxu0 0.0
    %469 = vmatpush.msra.mxu0 0.0
    %470 = vmatpush.msra.mxu0 0.0
    %471 = vmatpush.msra.mxu0 0.0
    %472 = vmatpush.msra.mxu0 0.0
    %473 = vmatpush.msra.mxu0 0.0
    %474 = vmatpush.msra.mxu0 0.0
    %475 = vmatpush.msra.mxu0 %v455
    %476 = vmatmul.f32.gmra.mxu0 %v458
    %v477 = vpop.f32.mrf.mxu0
    %v478 = vadd.f32 0.0, %v477
    %479 = vdwg.mxu0
    %480 = vrot.lane.b32.xlu0 %v191, 64
    %v481 = vpop.permute.xlu0 %480
    %v484 = vsel %vm305, %v401, 0
    %486 = vmatpush.msra.mxu0 0.0
    %487 = vmatpush.msra.mxu0 0.0
    %488 = vmatpush.msra.mxu0 0.0
    %489 = vmatpush.msra.mxu0 0.0
    %490 = vmatpush.msra.mxu0 0.0
    %491 = vmatpush.msra.mxu0 0.0
    %492 = vmatpush.msra.mxu0 0.0
    %493 = vmatpush.msra.mxu0 0.0
    %494 = vmatpush.msra.mxu0 0.0
    %495 = vmatpush.msra.mxu0 0.0
    %496 = vmatpush.msra.mxu0 0.0
    %497 = vmatpush.msra.mxu0 0.0
    %498 = vmatpush.msra.mxu0 0.0
    %499 = vmatpush.msra.mxu0 0.0
    %500 = vmatpush.msra.mxu0 0.0
    %501 = vmatpush.msra.mxu0 %v481
    %502 = vmatmul.f32.gmra.mxu0 %v484
    %v503 = vpop.f32.mrf.mxu0
    %v504 = vadd.f32 0.0, %v503
    %505 = vdwg.mxu0
    %v506 = vld [vmem:[%s4 + $0x1] sm:$0x1]
    %v507 = vld [vmem:[%s3] sm:$0xff]
    %v508 = vld [vmem:[%s3 + $0x8] sm:$0xff]
    %v510 = vsel %vm194, %v426, 0
    %v513 = vsel %vm194, %v452, 0
    %515 = vmatpush.msra.mxu0 0.0
    %516 = vmatpush.msra.mxu0 0.0
    %517 = vmatpush.msra.mxu0 0.0
    %518 = vmatpush.msra.mxu0 0.0
    %519 = vmatpush.msra.mxu0 0.0
    %520 = vmatpush.msra.mxu0 0.0
    %521 = vmatpush.msra.mxu0 0.0
    %522 = vmatpush.msra.mxu0 0.0
    %523 = vmatpush.msra.mxu0 0.0
    %524 = vmatpush.msra.mxu0 0.0
    %525 = vmatpush.msra.mxu0 0.0
    %526 = vmatpush.msra.mxu0 0.0
    %527 = vmatpush.msra.mxu0 0.0
    %528 = vmatpush.msra.mxu0 0.0
    %529 = vmatpush.msra.mxu0 %v508
    %530 = vmatpush.msra.mxu0 %v507
    %531 = vmatmul.f32.gmra.mxu0 %v510
    %v532 = vpop.f32.mrf.mxu0
    %v533 = vadd.f32 0.0, %v532
    %534 = vmatmul.f32.gmra.mxu0 %v513
    %v535 = vpop.f32.mrf.mxu0
    %v536 = vadd.f32 0.0, %v535
    %537 = vdwg.mxu0
    %v538 = vperm.slane %v506, 0
    %v539 = vadd.f32 %v538, %v533
    %v540 = vadd.f32 %v538, %v536
    %v541 = vld [vmem:[%s3 + $0x10] sm:$0xff]
    %v542 = vld [vmem:[%s3 + $0x18] sm:$0xff]
    %v544 = vsel %vm194, %v478, 0
    %v547 = vsel %vm194, %v504, 0
    %549 = vmatpush.msra.mxu0 0.0
    %550 = vmatpush.msra.mxu0 0.0
    %551 = vmatpush.msra.mxu0 0.0
    %552 = vmatpush.msra.mxu0 0.0
    %553 = vmatpush.msra.mxu0 0.0
    %554 = vmatpush.msra.mxu0 0.0
    %555 = vmatpush.msra.mxu0 0.0
    %556 = vmatpush.msra.mxu0 0.0
    %557 = vmatpush.msra.mxu0 0.0
    %558 = vmatpush.msra.mxu0 0.0
    %559 = vmatpush.msra.mxu0 0.0
    %560 = vmatpush.msra.mxu0 0.0
    %561 = vmatpush.msra.mxu0 0.0
    %562 = vmatpush.msra.mxu0 0.0
    %563 = vmatpush.msra.mxu0 %v542
    %564 = vmatpush.msra.mxu0 %v541
    %565 = vmatmul.f32.gmra.mxu0 %v544
    %v566 = vpop.f32.mrf.mxu0
    %v567 = vadd.f32 0.0, %v566
    %568 = vmatmul.f32.gmra.mxu0 %v547
    %v569 = vpop.f32.mrf.mxu0
    %v570 = vadd.f32 0.0, %v569
    %571 = vdwg.mxu0
    %v572 = vadd.f32 %v539, %v567
    %v573 = vadd.f32 %v540, %v570
    %v574 = vadd.f32 %v139, %v572
    %v575 = vadd.f32 %v140, %v573
    %v576 = vld [vmem:[%s4 + $0x2] sm:$0x1]
    %v577 = vld [vmem:[%s4 + $0x3] sm:$0x1]
    %v578 = vsel %vm83, %v574, 0.0
    %579 = vadd.xlane.f32.xlu0 %v578
    %v580 = vpop.xlane.xlu0 %579
    %v581 = vsel %vm83, %v575, 0.0
    %582 = vadd.xlane.f32.xlu0 %v581
    %v583 = vpop.xlane.xlu0 %582
    %v584 = vmul.f32 %v580, %v96
    %v585 = vmul.f32 %v583, %v96
    %v586 = vsub.f32 %v574, %v584
    %v587 = vsub.f32 %v575, %v585
    %v588 = vmul.f32 %v586, %v586
    %v589 = vmul.f32 %v587, %v587
    %v590 = vsel %vm83, %v588, 0.0
    %591 = vadd.xlane.f32.xlu0 %v590
    %v592 = vpop.xlane.xlu0 %591
    %v593 = vsel %vm83, %v589, 0.0
    %594 = vadd.xlane.f32.xlu0 %v593
    %v595 = vpop.xlane.xlu0 %594
    %v596 = vmul.f32 %v592, %v96
    %v597 = vmul.f32 %v595, %v96
    %v598 = vadd.f32 %v596, 1e-12
    %v599 = vadd.f32 %v597, 1e-12
    %v600 = vrsqrt.pop %v598
    %v601 = vmul.f32 %v600, %v598
    %v602 = vmul.f32 %v601, %v600
    %v603 = vmul.f32 0.5, %v602
    %v604 = vsub.f32 1.5, %v603
    %v605 = vmul.f32 %v600, %v604
    %vm606 = vweird.f32 %v598
    %vm607 = vweird.f32 %v600
    %vm608 = vmor %vm606, %vm607
    %v609 = vsel %vm608, %v600, %v605
    %v610 = vrsqrt.pop %v599
    %v611 = vmul.f32 %v610, %v599
    %v612 = vmul.f32 %v611, %v610
    %v613 = vmul.f32 0.5, %v612
    %v614 = vsub.f32 1.5, %v613
    %v615 = vmul.f32 %v610, %v614
    %vm616 = vweird.f32 %v599
    %vm617 = vweird.f32 %v610
    %vm618 = vmor %vm616, %vm617
    %v619 = vsel %vm618, %v610, %v615
    %v620 = vmul.f32 %v586, %v609
    %v621 = vmul.f32 %v587, %v619
    %v622 = vperm.slane %v576, 0
    %v623 = vmul.f32 %v620, %v622
    %v624 = vmul.f32 %v621, %v622
    %v625 = vperm.slane %v577, 0
    %v626 = vadd.f32 %v623, %v625
    %v627 = vadd.f32 %v624, %v625
    %v628 = vld [vmem:[%s2 + $0x20] sm:$0xff]
    %v629 = vld [vmem:[%s2 + $0x28] sm:$0xff]
    %v630 = vld [vmem:[%s2 + $0x30] sm:$0xff]
    %v631 = vld [vmem:[%s2 + $0x38] sm:$0xff]
    %v632 = vld [vmem:[%s4 + $0x4] sm:$0x1]
    %v633 = vperm.slane %v632, 0
    %v635 = vsel %vm83, %v626, 0
    %v638 = vsel %vm83, %v627, 0
    %640 = vmatpush.msra.mxu0 0.0
    %641 = vmatpush.msra.mxu0 0.0
    %642 = vmatpush.msra.mxu0 0.0
    %643 = vmatpush.msra.mxu0 0.0
    %644 = vmatpush.msra.mxu0 0.0
    %645 = vmatpush.msra.mxu0 0.0
    %646 = vmatpush.msra.mxu0 0.0
    %647 = vmatpush.msra.mxu0 0.0
    %648 = vmatpush.msra.mxu0 0.0
    %649 = vmatpush.msra.mxu0 0.0
    %650 = vmatpush.msra.mxu0 0.0
    %651 = vmatpush.msra.mxu0 0.0
    %652 = vmatpush.msra.mxu0 %v631
    %653 = vmatpush.msra.mxu0 %v630
    %654 = vmatpush.msra.mxu0 %v629
    %655 = vmatpush.msra.mxu0 %v628
    %656 = vmatmul.f32.gmra.mxu0 %v635
    %v657 = vpop.f32.mrf.mxu0
    %v658 = vadd.f32 %v633, %v657
    %659 = vmatmul.f32.gmra.mxu0 %v638
    %v660 = vpop.f32.mrf.mxu0
    %v661 = vadd.f32 %v633, %v660
    %662 = vdwg.mxu0
    %v663 = vmul.f32 %v658, 0.5
    %v664 = vmul.f32 %v661, 0.5
    %v665 = vmul.f32 %v658, 0.044715
    %v666 = vmul.f32 %v661, 0.044715
    %v667 = vmul.f32 %v665, %v658
    %v668 = vmul.f32 %v666, %v661
    %v669 = vmul.f32 %v667, %v658
    %v670 = vmul.f32 %v668, %v661
    %v671 = vadd.f32 %v658, %v669
    %v672 = vadd.f32 %v661, %v670
    %v673 = vmul.f32 %v671, 0.7978846
    %v674 = vmul.f32 %v672, 0.7978846
    %v675 = vtanh.pop %v673
    %v676 = vtanh.pop %v674
    %v677 = vadd.f32 %v675, 1.0
    %v678 = vadd.f32 %v676, 1.0
    %v679 = vmul.f32 %v663, %v677
    %v680 = vmul.f32 %v664, %v678
    %v681 = vld [vmem:[%s3 + $0x20] sm:$0xff]
    %v682 = vld [vmem:[%s3 + $0x28] sm:$0xff]
    %v683 = vld [vmem:[%s3 + $0x30] sm:$0xff]
    %v684 = vld [vmem:[%s3 + $0x38] sm:$0xff]
    %v685 = vld [vmem:[%s3 + $0x40] sm:$0xff]
    %v686 = vld [vmem:[%s3 + $0x48] sm:$0xff]
    %v687 = vld [vmem:[%s3 + $0x50] sm:$0xff]
    %v688 = vld [vmem:[%s3 + $0x58] sm:$0xff]
    %v689 = vld [vmem:[%s4 + $0x5] sm:$0x1]
    %v690 = vperm.slane %v689, 0
    %v692 = vsel %vm51, %v679, 0
    %v695 = vsel %vm51, %v680, 0
    %697 = vmatpush.msra.mxu0 0.0
    %698 = vmatpush.msra.mxu0 0.0
    %699 = vmatpush.msra.mxu0 0.0
    %700 = vmatpush.msra.mxu0 0.0
    %701 = vmatpush.msra.mxu0 0.0
    %702 = vmatpush.msra.mxu0 0.0
    %703 = vmatpush.msra.mxu0 0.0
    %704 = vmatpush.msra.mxu0 0.0
    %705 = vmatpush.msra.mxu0 %v688
    %706 = vmatpush.msra.mxu0 %v687
    %707 = vmatpush.msra.mxu0 %v686
    %708 = vmatpush.msra.mxu0 %v685
    %709 = vmatpush.msra.mxu0 %v684
    %710 = vmatpush.msra.mxu0 %v683
    %711 = vmatpush.msra.mxu0 %v682
    %712 = vmatpush.msra.mxu0 %v681
    %713 = vmatmul.f32.gmra.mxu0 %v692
    %v714 = vpop.f32.mrf.mxu0
    %v715 = vadd.f32 %v690, %v714
    %716 = vmatmul.f32.gmra.mxu0 %v695
    %v717 = vpop.f32.mrf.mxu0
    %v718 = vadd.f32 %v690, %v717
    %719 = vdwg.mxu0
    %v720 = vadd.f32 %v626, %v715
    %v721 = vadd.f32 %v627, %v718
    %v722 = vld [vmem:[%s4 + $0x6] sm:$0x1]
    %v723 = vld [vmem:[%s4 + $0x7] sm:$0x1]
    %v724 = vsel %vm83, %v720, 0.0
    %725 = vadd.xlane.f32.xlu0 %v724
    %v726 = vpop.xlane.xlu0 %725
    %v727 = vsel %vm83, %v721, 0.0
    %728 = vadd.xlane.f32.xlu0 %v727
    %v729 = vpop.xlane.xlu0 %728
    %v730 = vmul.f32 %v726, %v96
    %v731 = vmul.f32 %v729, %v96
    %v732 = vsub.f32 %v720, %v730
    %v733 = vsub.f32 %v721, %v731
    %v734 = vmul.f32 %v732, %v732
    %v735 = vmul.f32 %v733, %v733
    %v736 = vsel %vm83, %v734, 0.0
    %737 = vadd.xlane.f32.xlu0 %v736
    %v738 = vpop.xlane.xlu0 %737
    %v739 = vsel %vm83, %v735, 0.0
    %740 = vadd.xlane.f32.xlu0 %v739
    %v741 = vpop.xlane.xlu0 %740
    %v742 = vmul.f32 %v738, %v96
    %v743 = vmul.f32 %v741, %v96
    %v744 = vadd.f32 %v742, 1e-12
    %v745 = vadd.f32 %v743, 1e-12
    %v746 = vrsqrt.pop %v744
    %v747 = vmul.f32 %v746, %v744
    %v748 = vmul.f32 %v747, %v746
    %v749 = vmul.f32 0.5, %v748
    %v750 = vsub.f32 1.5, %v749
    %v751 = vmul.f32 %v746, %v750
    %vm752 = vweird.f32 %v744
    %vm753 = vweird.f32 %v746
    %vm754 = vmor %vm752, %vm753
    %v755 = vsel %vm754, %v746, %v751
    %v756 = vrsqrt.pop %v745
    %v757 = vmul.f32 %v756, %v745
    %v758 = vmul.f32 %v757, %v756
    %v759 = vmul.f32 0.5, %v758
    %v760 = vsub.f32 1.5, %v759
    %v761 = vmul.f32 %v756, %v760
    %vm762 = vweird.f32 %v745
    %vm763 = vweird.f32 %v756
    %vm764 = vmor %vm762, %vm763
    %v765 = vsel %vm764, %v756, %v761
    %v766 = vmul.f32 %v732, %v755
    %v767 = vmul.f32 %v733, %v765
    %v768 = vperm.slane %v722, 0
    %v769 = vmul.f32 %v766, %v768
    %v770 = vmul.f32 %v767, %v768
    %v771 = vperm.slane %v723, 0
    %v772 = vadd.f32 %v769, %v771
    %v773 = vadd.f32 %v770, %v771
    %s774 = scalar_lea.vmem %s2, 64
    %v775 = vld [vmem:[%s774] sm:$0xff]
    %v776 = vld [vmem:[%s774 + $0x8] sm:$0xff]
    %v777 = vld [vmem:[%s774 + $0x10] sm:$0xff]
    %v778 = vld [vmem:[%s774 + $0x18] sm:$0xff]
    %s779 = scalar_lea.vmem %s4, 8
    %v780 = vld [vmem:[%s779] sm:$0x1]
    %v781 = vperm.slane %v780, 0
    %v783 = vsel %vm83, %v772, 0
    %v786 = vsel %vm83, %v773, 0
    %788 = vmatpush.msra.mxu0 0.0
    %789 = vmatpush.msra.mxu0 0.0
    %790 = vmatpush.msra.mxu0 0.0
    %791 = vmatpush.msra.mxu0 0.0
    %792 = vmatpush.msra.mxu0 0.0
    %793 = vmatpush.msra.mxu0 0.0
    %794 = vmatpush.msra.mxu0 0.0
    %795 = vmatpush.msra.mxu0 0.0
    %796 = vmatpush.msra.mxu0 0.0
    %797 = vmatpush.msra.mxu0 0.0
    %798 = vmatpush.msra.mxu0 0.0
    %799 = vmatpush.msra.mxu0 0.0
    %800 = vmatpush.msra.mxu0 %v778
    %801 = vmatpush.msra.mxu0 %v777
    %802 = vmatpush.msra.mxu0 %v776
    %803 = vmatpush.msra.mxu0 %v775
    %804 = vmatmul.f32.gmra.mxu0 %v783
    %v805 = vpop.f32.mrf.mxu0
    %v806 = vadd.f32 %v781, %v805
    %807 = vmatmul.f32.gmra.mxu0 %v786
    %v808 = vpop.f32.mrf.mxu0
    %v809 = vadd.f32 %v781, %v808
    %810 = vdwg.mxu0
    %813 = vrot.lane.b32.xlu0 %v806, 112
    %v814 = vpop.permute.xlu0 %813
    %815 = vrot.lane.b32.xlu0 %v809, 112
    %v816 = vpop.permute.xlu0 %815
    %817 = vrot.lane.b32.xlu0 %v806, 96
    %v818 = vpop.permute.xlu0 %817
    %v819 = vsel %vm194, %v806, 0
    %v821 = vsel %vm194, %v818, 0
    %823 = vmatpush.xpose.msra.mxu0 0.0
    %824 = vmatpush.xpose.msra.mxu0 0.0
    %825 = vmatpush.xpose.msra.mxu0 0.0
    %826 = vmatpush.xpose.msra.mxu0 0.0
    %827 = vmatpush.xpose.msra.mxu0 0.0
    %828 = vmatpush.xpose.msra.mxu0 0.0
    %829 = vmatpush.xpose.msra.mxu0 0.0
    %830 = vmatpush.xpose.msra.mxu0 0.0
    %831 = vmatpush.xpose.msra.mxu0 0.0
    %832 = vmatpush.xpose.msra.mxu0 0.0
    %833 = vmatpush.xpose.msra.mxu0 0.0
    %834 = vmatpush.xpose.msra.mxu0 0.0
    %835 = vmatpush.xpose.msra.mxu0 0.0
    %836 = vmatpush.xpose.msra.mxu0 0.0
    %837 = vmatpush.xpose.msra.mxu0 0.0
    %838 = vmatpush.xpose.msra.mxu0 %v821
    %839 = vmatmul.f32.gmra.mxu0 %v819
    %v840 = vpop.f32.mrf.mxu0
    %v841 = vadd.f32 0.0, %v840
    %842 = vdwg.mxu0
    %843 = vrot.lane.b32.xlu0 %v809, 96
    %v844 = vpop.permute.xlu0 %843
    %v845 = vsel %vm194, %v809, 0
    %v847 = vsel %vm194, %v844, 0
    %849 = vmatpush.xpose.msra.mxu0 0.0
    %850 = vmatpush.xpose.msra.mxu0 0.0
    %851 = vmatpush.xpose.msra.mxu0 0.0
    %852 = vmatpush.xpose.msra.mxu0 0.0
    %853 = vmatpush.xpose.msra.mxu0 0.0
    %854 = vmatpush.xpose.msra.mxu0 0.0
    %855 = vmatpush.xpose.msra.mxu0 0.0
    %856 = vmatpush.xpose.msra.mxu0 0.0
    %857 = vmatpush.xpose.msra.mxu0 0.0
    %858 = vmatpush.xpose.msra.mxu0 0.0
    %859 = vmatpush.xpose.msra.mxu0 0.0
    %860 = vmatpush.xpose.msra.mxu0 0.0
    %861 = vmatpush.xpose.msra.mxu0 0.0
    %862 = vmatpush.xpose.msra.mxu0 0.0
    %863 = vmatpush.xpose.msra.mxu0 0.0
    %864 = vmatpush.xpose.msra.mxu0 %v847
    %865 = vmatmul.f32.gmra.mxu0 %v845
    %v866 = vpop.f32.mrf.mxu0
    %v867 = vadd.f32 0.0, %v866
    %868 = vdwg.mxu0
    %869 = vrot.lane.b32.xlu0 %v814, 96
    %v870 = vpop.permute.xlu0 %869
    %v871 = vsel %vm194, %v814, 0
    %v873 = vsel %vm194, %v870, 0
    %875 = vmatpush.xpose.msra.mxu0 0.0
    %876 = vmatpush.xpose.msra.mxu0 0.0
    %877 = vmatpush.xpose.msra.mxu0 0.0
    %878 = vmatpush.xpose.msra.mxu0 0.0
    %879 = vmatpush.xpose.msra.mxu0 0.0
    %880 = vmatpush.xpose.msra.mxu0 0.0
    %881 = vmatpush.xpose.msra.mxu0 0.0
    %882 = vmatpush.xpose.msra.mxu0 0.0
    %883 = vmatpush.xpose.msra.mxu0 0.0
    %884 = vmatpush.xpose.msra.mxu0 0.0
    %885 = vmatpush.xpose.msra.mxu0 0.0
    %886 = vmatpush.xpose.msra.mxu0 0.0
    %887 = vmatpush.xpose.msra.mxu0 0.0
    %888 = vmatpush.xpose.msra.mxu0 0.0
    %889 = vmatpush.xpose.msra.mxu0 0.0
    %890 = vmatpush.xpose.msra.mxu0 %v873
    %891 = vmatmul.f32.gmra.mxu0 %v871
    %v892 = vpop.f32.mrf.mxu0
    %v893 = vadd.f32 0.0, %v892
    %894 = vdwg.mxu0
    %895 = vrot.lane.b32.xlu0 %v816, 96
    %v896 = vpop.permute.xlu0 %895
    %v897 = vsel %vm194, %v816, 0
    %v899 = vsel %vm194, %v896, 0
    %901 = vmatpush.xpose.msra.mxu0 0.0
    %902 = vmatpush.xpose.msra.mxu0 0.0
    %903 = vmatpush.xpose.msra.mxu0 0.0
    %904 = vmatpush.xpose.msra.mxu0 0.0
    %905 = vmatpush.xpose.msra.mxu0 0.0
    %906 = vmatpush.xpose.msra.mxu0 0.0
    %907 = vmatpush.xpose.msra.mxu0 0.0
    %908 = vmatpush.xpose.msra.mxu0 0.0
    %909 = vmatpush.xpose.msra.mxu0 0.0
    %910 = vmatpush.xpose.msra.mxu0 0.0
    %911 = vmatpush.xpose.msra.mxu0 0.0
    %912 = vmatpush.xpose.msra.mxu0 0.0
    %913 = vmatpush.xpose.msra.mxu0 0.0
    %914 = vmatpush.xpose.msra.mxu0 0.0
    %915 = vmatpush.xpose.msra.mxu0 0.0
    %916 = vmatpush.xpose.msra.mxu0 %v899
    %917 = vmatmul.f32.gmra.mxu0 %v897
    %v918 = vpop.f32.mrf.mxu0
    %v919 = vadd.f32 0.0, %v918
    %920 = vdwg.mxu0
    %v921 = vmul.f32 %v841, 0.25
    %v922 = vmul.f32 %v867, 0.25
    %v923 = vmul.f32 %v893, 0.25
    %v924 = vmul.f32 %v919, 0.25
    %v925 = vadd.f32 %v921, %v147
    %v926 = vadd.f32 %v922, %v148
    %v927 = vadd.f32 %v923, %v147
    %v928 = vadd.f32 %v924, %v148
    %v929 = vsel %vm305, %v925, -inf
    %930 = vmax.xlane.f32.xlu0 %v929
    %v931 = vpop.xlane.xlu0 %930
    %v932 = vsel %vm305, %v926, -inf
    %933 = vmax.xlane.f32.xlu0 %v932
    %v934 = vpop.xlane.xlu0 %933
    %v935 = vsel %vm305, %v927, -inf
    %936 = vmax.xlane.f32.xlu0 %v935
    %v937 = vpop.xlane.xlu0 %936
    %v938 = vsel %vm305, %v928, -inf
    %939 = vmax.xlane.f32.xlu0 %v938
    %v940 = vpop.xlane.xlu0 %939
    %v941 = vsub.f32 %v925, %v931
    %v942 = vsub.f32 %v926, %v934
    %v943 = vsub.f32 %v927, %v937
    %v944 = vsub.f32 %v928, %v940
    %v945 = vmul.f32 %v941, 1.442695
    %v946 = vpow.pop %v945
    %v947 = vmul.f32 %v942, 1.442695
    %v948 = vpow.pop %v947
    %v949 = vmul.f32 %v943, 1.442695
    %v950 = vpow.pop %v949
    %v951 = vmul.f32 %v944, 1.442695
    %v952 = vpow.pop %v951
    %v953 = vsel %vm305, %v946, 0.0
    %954 = vadd.xlane.f32.xlu0 %v953
    %v955 = vpop.xlane.xlu0 %954
    %v956 = vsel %vm305, %v948, 0.0
    %957 = vadd.xlane.f32.xlu0 %v956
    %v958 = vpop.xlane.xlu0 %957
    %v959 = vsel %vm305, %v950, 0.0
    %960 = vadd.xlane.f32.xlu0 %v959
    %v961 = vpop.xlane.xlu0 %960
    %v962 = vsel %vm305, %v952, 0.0
    %963 = vadd.xlane.f32.xlu0 %v962
    %v964 = vpop.xlane.xlu0 %963
    %v965 = vrcp.pop %v955
    %v966 = vmul.f32 %v955, %v965
    %v967 = vsub.f32 1.0, %v966
    %v968 = vmul.f32 %v965, %v967
    %v969 = vadd.f32 %v965, %v968
    %vm970 = vweird.f32 %v955
    %vm971 = vweird.f32 %v965
    %vm972 = vmor %vm970, %vm971
    %v973 = vsel %vm972, %v965, %v969
    %v974 = vand.u32 2147483647, %v955
    %vm975 = vcmp.eq.f32.partialorder %v974, 8.507059e+37
    %v976 = vand.u32 %v955, 2147483648
    %v977 = vor.u32 1.1754944e-38, %v976
    %v978 = vsel %vm975, %v977, %v973
    %v979 = vmul.f32 %v946, %v978
    %v980 = vrcp.pop %v958
    %v981 = vmul.f32 %v958, %v980
    %v982 = vsub.f32 1.0, %v981
    %v983 = vmul.f32 %v980, %v982
    %v984 = vadd.f32 %v980, %v983
    %vm985 = vweird.f32 %v958
    %vm986 = vweird.f32 %v980
    %vm987 = vmor %vm985, %vm986
    %v988 = vsel %vm987, %v980, %v984
    %v989 = vand.u32 2147483647, %v958
    %vm990 = vcmp.eq.f32.partialorder %v989, 8.507059e+37
    %v991 = vand.u32 %v958, 2147483648
    %v992 = vor.u32 1.1754944e-38, %v991
    %v993 = vsel %vm990, %v992, %v988
    %v994 = vmul.f32 %v948, %v993
    %v995 = vrcp.pop %v961
    %v996 = vmul.f32 %v961, %v995
    %v997 = vsub.f32 1.0, %v996
    %v998 = vmul.f32 %v995, %v997
    %v999 = vadd.f32 %v995, %v998
    %vm1000 = vweird.f32 %v961
    %vm1001 = vweird.f32 %v995
    %vm1002 = vmor %vm1000, %vm1001
    %v1003 = vsel %vm1002, %v995, %v999
    %v1004 = vand.u32 2147483647, %v961
    %vm1005 = vcmp.eq.f32.partialorder %v1004, 8.507059e+37
    %v1006 = vand.u32 %v961, 2147483648
    %v1007 = vor.u32 1.1754944e-38, %v1006
    %v1008 = vsel %vm1005, %v1007, %v1003
    %v1009 = vmul.f32 %v950, %v1008
    %v1010 = vrcp.pop %v964
    %v1011 = vmul.f32 %v964, %v1010
    %v1012 = vsub.f32 1.0, %v1011
    %v1013 = vmul.f32 %v1010, %v1012
    %v1014 = vadd.f32 %v1010, %v1013
    %vm1015 = vweird.f32 %v964
    %vm1016 = vweird.f32 %v1010
    %vm1017 = vmor %vm1015, %vm1016
    %v1018 = vsel %vm1017, %v1010, %v1014
    %v1019 = vand.u32 2147483647, %v964
    %vm1020 = vcmp.eq.f32.partialorder %v1019, 8.507059e+37
    %v1021 = vand.u32 %v964, 2147483648
    %v1022 = vor.u32 1.1754944e-38, %v1021
    %v1023 = vsel %vm1020, %v1022, %v1018
    %v1024 = vmul.f32 %v952, %v1023
    %1025 = vrot.lane.b32.xlu0 %v806, 64
    %v1026 = vpop.permute.xlu0 %1025
    %v1029 = vsel %vm305, %v979, 0
    %1031 = vmatpush.msra.mxu0 0.0
    %1032 = vmatpush.msra.mxu0 0.0
    %1033 = vmatpush.msra.mxu0 0.0
    %1034 = vmatpush.msra.mxu0 0.0
    %1035 = vmatpush.msra.mxu0 0.0
    %1036 = vmatpush.msra.mxu0 0.0
    %1037 = vmatpush.msra.mxu0 0.0
    %1038 = vmatpush.msra.mxu0 0.0
    %1039 = vmatpush.msra.mxu0 0.0
    %1040 = vmatpush.msra.mxu0 0.0
    %1041 = vmatpush.msra.mxu0 0.0
    %1042 = vmatpush.msra.mxu0 0.0
    %1043 = vmatpush.msra.mxu0 0.0
    %1044 = vmatpush.msra.mxu0 0.0
    %1045 = vmatpush.msra.mxu0 0.0
    %1046 = vmatpush.msra.mxu0 %v1026
    %1047 = vmatmul.f32.gmra.mxu0 %v1029
    %v1048 = vpop.f32.mrf.mxu0
    %v1049 = vadd.f32 0.0, %v1048
    %1050 = vdwg.mxu0
    %1051 = vrot.lane.b32.xlu0 %v809, 64
    %v1052 = vpop.permute.xlu0 %1051
    %v1055 = vsel %vm305, %v994, 0
    %1057 = vmatpush.msra.mxu0 0.0
    %1058 = vmatpush.msra.mxu0 0.0
    %1059 = vmatpush.msra.mxu0 0.0
    %1060 = vmatpush.msra.mxu0 0.0
    %1061 = vmatpush.msra.mxu0 0.0
    %1062 = vmatpush.msra.mxu0 0.0
    %1063 = vmatpush.msra.mxu0 0.0
    %1064 = vmatpush.msra.mxu0 0.0
    %1065 = vmatpush.msra.mxu0 0.0
    %1066 = vmatpush.msra.mxu0 0.0
    %1067 = vmatpush.msra.mxu0 0.0
    %1068 = vmatpush.msra.mxu0 0.0
    %1069 = vmatpush.msra.mxu0 0.0
    %1070 = vmatpush.msra.mxu0 0.0
    %1071 = vmatpush.msra.mxu0 0.0
    %1072 = vmatpush.msra.mxu0 %v1052
    %1073 = vmatmul.f32.gmra.mxu0 %v1055
    %v1074 = vpop.f32.mrf.mxu0
    %v1075 = vadd.f32 0.0, %v1074
    %1076 = vdwg.mxu0
    %1077 = vrot.lane.b32.xlu0 %v814, 64
    %v1078 = vpop.permute.xlu0 %1077
    %v1081 = vsel %vm305, %v1009, 0
    %1083 = vmatpush.msra.mxu0 0.0
    %1084 = vmatpush.msra.mxu0 0.0
    %1085 = vmatpush.msra.mxu0 0.0
    %1086 = vmatpush.msra.mxu0 0.0
    %1087 = vmatpush.msra.mxu0 0.0
    %1088 = vmatpush.msra.mxu0 0.0
    %1089 = vmatpush.msra.mxu0 0.0
    %1090 = vmatpush.msra.mxu0 0.0
    %1091 = vmatpush.msra.mxu0 0.0
    %1092 = vmatpush.msra.mxu0 0.0
    %1093 = vmatpush.msra.mxu0 0.0
    %1094 = vmatpush.msra.mxu0 0.0
    %1095 = vmatpush.msra.mxu0 0.0
    %1096 = vmatpush.msra.mxu0 0.0
    %1097 = vmatpush.msra.mxu0 0.0
    %1098 = vmatpush.msra.mxu0 %v1078
    %1099 = vmatmul.f32.gmra.mxu0 %v1081
    %v1100 = vpop.f32.mrf.mxu0
    %v1101 = vadd.f32 0.0, %v1100
    %1102 = vdwg.mxu0
    %1103 = vrot.lane.b32.xlu0 %v816, 64
    %v1104 = vpop.permute.xlu0 %1103
    %v1107 = vsel %vm305, %v1024, 0
    %1109 = vmatpush.msra.mxu0 0.0
    %1110 = vmatpush.msra.mxu0 0.0
    %1111 = vmatpush.msra.mxu0 0.0
    %1112 = vmatpush.msra.mxu0 0.0
    %1113 = vmatpush.msra.mxu0 0.0
    %1114 = vmatpush.msra.mxu0 0.0
    %1115 = vmatpush.msra.mxu0 0.0
    %1116 = vmatpush.msra.mxu0 0.0
    %1117 = vmatpush.msra.mxu0 0.0
    %1118 = vmatpush.msra.mxu0 0.0
    %1119 = vmatpush.msra.mxu0 0.0
    %1120 = vmatpush.msra.mxu0 0.0
    %1121 = vmatpush.msra.mxu0 0.0
    %1122 = vmatpush.msra.mxu0 0.0
    %1123 = vmatpush.msra.mxu0 0.0
    %1124 = vmatpush.msra.mxu0 %v1104
    %1125 = vmatmul.f32.gmra.mxu0 %v1107
    %v1126 = vpop.f32.mrf.mxu0
    %v1127 = vadd.f32 0.0, %v1126
    %1128 = vdwg.mxu0
    %v1129 = vld [vmem:[%s779 + $0x1] sm:$0x1]
    %s1130 = scalar_lea.vmem %s3, 96
    %v1131 = vld [vmem:[%s1130] sm:$0xff]
    %v1132 = vld [vmem:[%s1130 + $0x8] sm:$0xff]
    %v1134 = vsel %vm194, %v1049, 0
    %v1137 = vsel %vm194, %v1075, 0
    %1139 = vmatpush.msra.mxu0 0.0
    %1140 = vmatpush.msra.mxu0 0.0
    %1141 = vmatpush.msra.mxu0 0.0
    %1142 = vmatpush.msra.mxu0 0.0
    %1143 = vmatpush.msra.mxu0 0.0
    %1144 = vmatpush.msra.mxu0 0.0
    %1145 = vmatpush.msra.mxu0 0.0
    %1146 = vmatpush.msra.mxu0 0.0
    %1147 = vmatpush.msra.mxu0 0.0
    %1148 = vmatpush.msra.mxu0 0.0
    %1149 = vmatpush.msra.mxu0 0.0
    %1150 = vmatpush.msra.mxu0 0.0
    %1151 = vmatpush.msra.mxu0 0.0
    %1152 = vmatpush.msra.mxu0 0.0
    %1153 = vmatpush.msra.mxu0 %v1132
    %1154 = vmatpush.msra.mxu0 %v1131
    %1155 = vmatmul.f32.gmra.mxu0 %v1134
    %v1156 = vpop.f32.mrf.mxu0
    %v1157 = vadd.f32 0.0, %v1156
    %1158 = vmatmul.f32.gmra.mxu0 %v1137
    %v1159 = vpop.f32.mrf.mxu0
    %v1160 = vadd.f32 0.0, %v1159
    %1161 = vdwg.mxu0
    %v1162 = vperm.slane %v1129, 0
    %v1163 = vadd.f32 %v1162, %v1157
    %v1164 = vadd.f32 %v1162, %v1160
    %v1165 = vld [vmem:[%s1130 + $0x10] sm:$0xff]
    %v1166 = vld [vmem:[%s1130 + $0x18] sm:$0xff]
    %v1168 = vsel %vm194, %v1101, 0
    %v1171 = vsel %vm194, %v1127, 0
    %1173 = vmatpush.msra.mxu0 0.0
    %1174 = vmatpush.msra.mxu0 0.0
    %1175 = vmatpush.msra.mxu0 0.0
    %1176 = vmatpush.msra.mxu0 0.0
    %1177 = vmatpush.msra.mxu0 0.0
    %1178 = vmatpush.msra.mxu0 0.0
    %1179 = vmatpush.msra.mxu0 0.0
    %1180 = vmatpush.msra.mxu0 0.0
    %1181 = vmatpush.msra.mxu0 0.0
    %1182 = vmatpush.msra.mxu0 0.0
    %1183 = vmatpush.msra.mxu0 0.0
    %1184 = vmatpush.msra.mxu0 0.0
    %1185 = vmatpush.msra.mxu0 0.0
    %1186 = vmatpush.msra.mxu0 0.0
    %1187 = vmatpush.msra.mxu0 %v1166
    %1188 = vmatpush.msra.mxu0 %v1165
    %1189 = vmatmul.f32.gmra.mxu0 %v1168
    %v1190 = vpop.f32.mrf.mxu0
    %v1191 = vadd.f32 0.0, %v1190
    %1192 = vmatmul.f32.gmra.mxu0 %v1171
    %v1193 = vpop.f32.mrf.mxu0
    %v1194 = vadd.f32 0.0, %v1193
    %1195 = vdwg.mxu0
    %v1196 = vadd.f32 %v1163, %v1191
    %v1197 = vadd.f32 %v1164, %v1194
    %v1198 = vadd.f32 %v772, %v1196
    %v1199 = vadd.f32 %v773, %v1197
    %v1200 = vld [vmem:[%s779 + $0x2] sm:$0x1]
    %v1201 = vld [vmem:[%s779 + $0x3] sm:$0x1]
    %v1202 = vsel %vm83, %v1198, 0.0
    %1203 = vadd.xlane.f32.xlu0 %v1202
    %v1204 = vpop.xlane.xlu0 %1203
    %v1205 = vsel %vm83, %v1199, 0.0
    %1206 = vadd.xlane.f32.xlu0 %v1205
    %v1207 = vpop.xlane.xlu0 %1206
    %v1208 = vmul.f32 %v1204, %v96
    %v1209 = vmul.f32 %v1207, %v96
    %v1210 = vsub.f32 %v1198, %v1208
    %v1211 = vsub.f32 %v1199, %v1209
    %v1212 = vmul.f32 %v1210, %v1210
    %v1213 = vmul.f32 %v1211, %v1211
    %v1214 = vsel %vm83, %v1212, 0.0
    %1215 = vadd.xlane.f32.xlu0 %v1214
    %v1216 = vpop.xlane.xlu0 %1215
    %v1217 = vsel %vm83, %v1213, 0.0
    %1218 = vadd.xlane.f32.xlu0 %v1217
    %v1219 = vpop.xlane.xlu0 %1218
    %v1220 = vmul.f32 %v1216, %v96
    %v1221 = vmul.f32 %v1219, %v96
    %v1222 = vadd.f32 %v1220, 1e-12
    %v1223 = vadd.f32 %v1221, 1e-12
    %v1224 = vrsqrt.pop %v1222
    %v1225 = vmul.f32 %v1224, %v1222
    %v1226 = vmul.f32 %v1225, %v1224
    %v1227 = vmul.f32 0.5, %v1226
    %v1228 = vsub.f32 1.5, %v1227
    %v1229 = vmul.f32 %v1224, %v1228
    %vm1230 = vweird.f32 %v1222
    %vm1231 = vweird.f32 %v1224
    %vm1232 = vmor %vm1230, %vm1231
    %v1233 = vsel %vm1232, %v1224, %v1229
    %v1234 = vrsqrt.pop %v1223
    %v1235 = vmul.f32 %v1234, %v1223
    %v1236 = vmul.f32 %v1235, %v1234
    %v1237 = vmul.f32 0.5, %v1236
    %v1238 = vsub.f32 1.5, %v1237
    %v1239 = vmul.f32 %v1234, %v1238
    %vm1240 = vweird.f32 %v1223
    %vm1241 = vweird.f32 %v1234
    %vm1242 = vmor %vm1240, %vm1241
    %v1243 = vsel %vm1242, %v1234, %v1239
    %v1244 = vmul.f32 %v1210, %v1233
    %v1245 = vmul.f32 %v1211, %v1243
    %v1246 = vperm.slane %v1200, 0
    %v1247 = vmul.f32 %v1244, %v1246
    %v1248 = vmul.f32 %v1245, %v1246
    %v1249 = vperm.slane %v1201, 0
    %v1250 = vadd.f32 %v1247, %v1249
    %v1251 = vadd.f32 %v1248, %v1249
    %v1252 = vld [vmem:[%s774 + $0x20] sm:$0xff]
    %v1253 = vld [vmem:[%s774 + $0x28] sm:$0xff]
    %v1254 = vld [vmem:[%s774 + $0x30] sm:$0xff]
    %v1255 = vld [vmem:[%s774 + $0x38] sm:$0xff]
    %v1256 = vld [vmem:[%s779 + $0x4] sm:$0x1]
    %v1257 = vperm.slane %v1256, 0
    %v1259 = vsel %vm83, %v1250, 0
    %v1262 = vsel %vm83, %v1251, 0
    %1264 = vmatpush.msra.mxu0 0.0
    %1265 = vmatpush.msra.mxu0 0.0
    %1266 = vmatpush.msra.mxu0 0.0
    %1267 = vmatpush.msra.mxu0 0.0
    %1268 = vmatpush.msra.mxu0 0.0
    %1269 = vmatpush.msra.mxu0 0.0
    %1270 = vmatpush.msra.mxu0 0.0
    %1271 = vmatpush.msra.mxu0 0.0
    %1272 = vmatpush.msra.mxu0 0.0
    %1273 = vmatpush.msra.mxu0 0.0
    %1274 = vmatpush.msra.mxu0 0.0
    %1275 = vmatpush.msra.mxu0 0.0
    %1276 = vmatpush.msra.mxu0 %v1255
    %1277 = vmatpush.msra.mxu0 %v1254
    %1278 = vmatpush.msra.mxu0 %v1253
    %1279 = vmatpush.msra.mxu0 %v1252
    %1280 = vmatmul.f32.gmra.mxu0 %v1259
    %v1281 = vpop.f32.mrf.mxu0
    %v1282 = vadd.f32 %v1257, %v1281
    %1283 = vmatmul.f32.gmra.mxu0 %v1262
    %v1284 = vpop.f32.mrf.mxu0
    %v1285 = vadd.f32 %v1257, %v1284
    %1286 = vdwg.mxu0
    %v1287 = vmul.f32 %v1282, 0.5
    %v1288 = vmul.f32 %v1285, 0.5
    %v1289 = vmul.f32 %v1282, 0.044715
    %v1290 = vmul.f32 %v1285, 0.044715
    %v1291 = vmul.f32 %v1289, %v1282
    %v1292 = vmul.f32 %v1290, %v1285
    %v1293 = vmul.f32 %v1291, %v1282
    %v1294 = vmul.f32 %v1292, %v1285
    %v1295 = vadd.f32 %v1282, %v1293
    %v1296 = vadd.f32 %v1285, %v1294
    %v1297 = vmul.f32 %v1295, 0.7978846
    %v1298 = vmul.f32 %v1296, 0.7978846
    %v1299 = vtanh.pop %v1297
    %v1300 = vtanh.pop %v1298
    %v1301 = vadd.f32 %v1299, 1.0
    %v1302 = vadd.f32 %v1300, 1.0
    %v1303 = vmul.f32 %v1287, %v1301
    %v1304 = vmul.f32 %v1288, %v1302
    %v1305 = vld [vmem:[%s1130 + $0x20] sm:$0xff]
    %v1306 = vld [vmem:[%s1130 + $0x28] sm:$0xff]
    %v1307 = vld [vmem:[%s1130 + $0x30] sm:$0xff]
    %v1308 = vld [vmem:[%s1130 + $0x38] sm:$0xff]
    %v1309 = vld [vmem:[%s1130 + $0x40] sm:$0xff]
    %v1310 = vld [vmem:[%s1130 + $0x48] sm:$0xff]
    %v1311 = vld [vmem:[%s1130 + $0x50] sm:$0xff]
    %v1312 = vld [vmem:[%s1130 + $0x58] sm:$0xff]
    %v1313 = vld [vmem:[%s779 + $0x5] sm:$0x1]
    %v1314 = vperm.slane %v1313, 0
    %v1316 = vsel %vm51, %v1303, 0
    %v1319 = vsel %vm51, %v1304, 0
    %1321 = vmatpush.msra.mxu0 0.0
    %1322 = vmatpush.msra.mxu0 0.0
    %1323 = vmatpush.msra.mxu0 0.0
    %1324 = vmatpush.msra.mxu0 0.0
    %1325 = vmatpush.msra.mxu0 0.0
    %1326 = vmatpush.msra.mxu0 0.0
    %1327 = vmatpush.msra.mxu0 0.0
    %1328 = vmatpush.msra.mxu0 0.0
    %1329 = vmatpush.msra.mxu0 %v1312
    %1330 = vmatpush.msra.mxu0 %v1311
    %1331 = vmatpush.msra.mxu0 %v1310
    %1332 = vmatpush.msra.mxu0 %v1309
    %1333 = vmatpush.msra.mxu0 %v1308
    %1334 = vmatpush.msra.mxu0 %v1307
    %1335 = vmatpush.msra.mxu0 %v1306
    %1336 = vmatpush.msra.mxu0 %v1305
    %1337 = vmatmul.f32.gmra.mxu0 %v1316
    %v1338 = vpop.f32.mrf.mxu0
    %v1339 = vadd.f32 %v1314, %v1338
    %1340 = vmatmul.f32.gmra.mxu0 %v1319
    %v1341 = vpop.f32.mrf.mxu0
    %v1342 = vadd.f32 %v1314, %v1341
    %1343 = vdwg.mxu0
    %v1344 = vadd.f32 %v1250, %v1339
    %v1345 = vadd.f32 %v1251, %v1342
    %v1346 = vld [vmem:[%s779 + $0x6] sm:$0x1]
    %v1347 = vld [vmem:[%s779 + $0x7] sm:$0x1]
    %v1348 = vsel %vm83, %v1344, 0.0
    %1349 = vadd.xlane.f32.xlu0 %v1348
    %v1350 = vpop.xlane.xlu0 %1349
    %v1351 = vsel %vm83, %v1345, 0.0
    %1352 = vadd.xlane.f32.xlu0 %v1351
    %v1353 = vpop.xlane.xlu0 %1352
    %v1354 = vmul.f32 %v1350, %v96
    %v1355 = vmul.f32 %v1353, %v96
    %v1356 = vsub.f32 %v1344, %v1354
    %v1357 = vsub.f32 %v1345, %v1355
    %v1358 = vmul.f32 %v1356, %v1356
    %v1359 = vmul.f32 %v1357, %v1357
    %v1360 = vsel %vm83, %v1358, 0.0
    %1361 = vadd.xlane.f32.xlu0 %v1360
    %v1362 = vpop.xlane.xlu0 %1361
    %v1363 = vsel %vm83, %v1359, 0.0
    %1364 = vadd.xlane.f32.xlu0 %v1363
    %v1365 = vpop.xlane.xlu0 %1364
    %v1366 = vmul.f32 %v1362, %v96
    %v1367 = vmul.f32 %v1365, %v96
    %v1368 = vadd.f32 %v1366, 1e-12
    %v1369 = vadd.f32 %v1367, 1e-12
    %v1370 = vrsqrt.pop %v1368
    %v1371 = vmul.f32 %v1370, %v1368
    %v1372 = vmul.f32 %v1371, %v1370
    %v1373 = vmul.f32 0.5, %v1372
    %v1374 = vsub.f32 1.5, %v1373
    %v1375 = vmul.f32 %v1370, %v1374
    %vm1376 = vweird.f32 %v1368
    %vm1377 = vweird.f32 %v1370
    %vm1378 = vmor %vm1376, %vm1377
    %v1379 = vsel %vm1378, %v1370, %v1375
    %v1380 = vrsqrt.pop %v1369
    %v1381 = vmul.f32 %v1380, %v1369
    %v1382 = vmul.f32 %v1381, %v1380
    %v1383 = vmul.f32 0.5, %v1382
    %v1384 = vsub.f32 1.5, %v1383
    %v1385 = vmul.f32 %v1380, %v1384
    %vm1386 = vweird.f32 %v1369
    %vm1387 = vweird.f32 %v1380
    %vm1388 = vmor %vm1386, %vm1387
    %v1389 = vsel %vm1388, %v1380, %v1385
    %v1390 = vmul.f32 %v1356, %v1379
    %v1391 = vmul.f32 %v1357, %v1389
    %v1392 = vperm.slane %v1346, 0
    %v1393 = vmul.f32 %v1390, %v1392
    %v1394 = vmul.f32 %v1391, %v1392
    %v1395 = vperm.slane %v1347, 0
    %v1396 = vadd.f32 %v1393, %v1395
    %v1397 = vadd.f32 %v1394, %v1395
    %v1398 = vld [vmem:[%s5] sm:$0xff]
    %v1399 = vld [vmem:[%s5 + $0x8] sm:$0xff]
    %v1400 = vld [vmem:[%s5 + $0x10] sm:$0xff]
    %v1401 = vld [vmem:[%s5 + $0x18] sm:$0xff]
    %v1402 = vld [vmem:[%s6 + $0x2] sm:$0x1]
    %v1403 = vperm.slane %v1402, 0
    %v1405 = vsel %vm83, %v1396, 0
    %v1408 = vsel %vm83, %v1397, 0
    %1410 = vmatpush.msra.mxu0 0.0
    %1411 = vmatpush.msra.mxu0 0.0
    %1412 = vmatpush.msra.mxu0 0.0
    %1413 = vmatpush.msra.mxu0 0.0
    %1414 = vmatpush.msra.mxu0 0.0
    %1415 = vmatpush.msra.mxu0 0.0
    %1416 = vmatpush.msra.mxu0 0.0
    %1417 = vmatpush.msra.mxu0 0.0
    %1418 = vmatpush.msra.mxu0 0.0
    %1419 = vmatpush.msra.mxu0 0.0
    %1420 = vmatpush.msra.mxu0 0.0
    %1421 = vmatpush.msra.mxu0 0.0
    %1422 = vmatpush.msra.mxu0 %v1401
    %1423 = vmatpush.msra.mxu0 %v1400
    %1424 = vmatpush.msra.mxu0 %v1399
    %1425 = vmatpush.msra.mxu0 %v1398
    %1426 = vmatmul.f32.gmra.mxu0 %v1405
    %v1427 = vpop.f32.mrf.mxu0
    %v1428 = vadd.f32 %v1403, %v1427
    %1429 = vmatmul.f32.gmra.mxu0 %v1408
    %v1430 = vpop.f32.mrf.mxu0
    %v1431 = vadd.f32 %v1403, %v1430
    %1432 = vdwg.mxu0
    %v1433 = vtanh.pop %v1428
    %v1434 = vtanh.pop %v1431
    %s1435 = scalar_lea.vmem %s5, 32
    %v1436 = vld [vmem:[%s1435] sm:$0xff]
    %v1437 = vld [vmem:[%s1435 + $0x8] sm:$0xff]
    %v1438 = vld [vmem:[%s1435 + $0x10] sm:$0xff]
    %v1439 = vld [vmem:[%s1435 + $0x18] sm:$0xff]
    %v1440 = vld [vmem:[%s6 + $0x3] sm:$0x1]
    %v1441 = vperm.slane %v1440, 0
    %v1443 = vsel %vm83, %v1433, 0
    %v1446 = vsel %vm83, %v1434, 0
    %1448 = vmatpush.msra.mxu0 0.0
    %1449 = vmatpush.msra.mxu0 0.0
    %1450 = vmatpush.msra.mxu0 0.0
    %1451 = vmatpush.msra.mxu0 0.0
    %1452 = vmatpush.msra.mxu0 0.0
    %1453 = vmatpush.msra.mxu0 0.0
    %1454 = vmatpush.msra.mxu0 0.0
    %1455 = vmatpush.msra.mxu0 0.0
    %1456 = vmatpush.msra.mxu0 0.0
    %1457 = vmatpush.msra.mxu0 0.0
    %1458 = vmatpush.msra.mxu0 0.0
    %1459 = vmatpush.msra.mxu0 0.0
    %1460 = vmatpush.msra.mxu0 %v1439
    %1461 = vmatpush.msra.mxu0 %v1438
    %1462 = vmatpush.msra.mxu0 %v1437
    %1463 = vmatpush.msra.mxu0 %v1436
    %1464 = vmatmul.f32.gmra.mxu0 %v1443
    %v1465 = vpop.f32.mrf.mxu0
    %v1466 = vadd.f32 %v1441, %v1465
    %1467 = vmatmul.f32.gmra.mxu0 %v1446
    %v1468 = vpop.f32.mrf.mxu0
    %v1469 = vadd.f32 %v1441, %v1468
    %1470 = vdwg.mxu0
    %1471 = vst [vmem:[#allocation2] sm:$0xff] %v1466
    %1472 = vst [vmem:[#allocation2 + $0x8] sm:$0xff] %v1469
    // Predicated region
    $region30: #{tpu_custom_call.1} parent=1 // pred_check
      _
    $region31: #{tpu_custom_call.1} parent=1 // pred_check_branch
      %1474 = sbr.rel (0) target = $region33
    $region32: #{tpu_custom_call.1} parent=1 // pred_region
      %1476 = vsyncadd [#allocation3], 0
      %s1477 = sshll.u32 [#allocation2], 4
      %s1478 = int_to_ptr.vmem [resolvable:$true] %s1477
      %s1479 = sshll.u32 %s7, 4
      %s1480 = int_to_ptr.hbm [resolvable:$true] %s1479
      %1485 = dma.vmem_to_hbm [thread:$0]  %s1478, 256, %s1480, [#allocation3], 128, 128, 8
    $region33: #{tpu_custom_call.1} parent=1 // pred_fallthru
      _
    // Predicated region
    $region34: #{tpu_custom_call.1} parent=1 // pred_check
      _
    $region35: #{tpu_custom_call.1} parent=1 // pred_check_branch
      %1487 = sbr.rel (0) target = $region37
    $region36: #{tpu_custom_call.1} parent=1 // pred_region
      %1489 = dma.done [#allocation3], 256
    $region37: #{tpu_custom_call.1} parent=1 // pred_fallthru
      _
    %1490 = vsyncpa [#allocation3], 1

</llo_original>
